<compile_context>
chip_gen: v5e
topology: v5e:2x2
jax: 0.10.0
libtpu: 0.0.40
codegen_flags: <defaults>
</compile_context>

<pallas_src>
import numpy as np
import jax
import jax.numpy as jnp
from jax.experimental import pallas as pl
from jax.experimental.pallas import tpu as pltpu

OUT_REAL = 400   # 4 channels * 10 * 10
OUT_PAD = 512    # lane-dense padded output width (multiple of 128)


# -----------------------------------------------------------------------------
# Parameter setup (glue, plain numpy): turn ConvTranspose2d weights into dense
# (Cin*Hi*Wi, Cout*Ho*Wo) matmul matrices.  Static, exact re-expression.
# -----------------------------------------------------------------------------
def deconv_as_matmul(W, bias, stride, pad, Hi, Wi):
    """W: (Cin, Cout, K, K) ConvTranspose2d weight (PyTorch layout).
    Returns (M, b_vec, Ho, Wo) with out_flat = in_flat @ M + b_vec,
    both flats channel-major."""
    Cin, Cout, K, _ = W.shape
    Ho = (Hi - 1) * stride - 2 * pad + K
    Wo = (Wi - 1) * stride - 2 * pad + K
    M = np.zeros((Cin, Hi, Wi, Cout, Ho, Wo), dtype=np.float32)
    for ii in range(Hi):
        for ij in range(Wi):
            for oi in range(Ho):
                for oj in range(Wo):
                    ki = oi + pad - stride * ii
                    kj = oj + pad - stride * ij
                    if 0 <= ki < K and 0 <= kj < K:
                        M[:, ii, ij, :, oi, oj] = W[:, :, ki, kj]
    M = M.reshape(Cin * Hi * Wi, Cout * Ho * Wo)
    b_vec = np.repeat(np.asarray(bias, dtype=np.float32), Ho * Wo)  # channel-major
    return M, b_vec, Ho, Wo


# -----------------------------------------------------------------------------
# Pallas kernel: fused  relu(x@W1+b1) -> relu(.@W2+b2) -> .@W3+b3
# Dot inputs bf16, accumulation f32, bias+ReLU f32 (works on v5e's f32-only VPU).
# -----------------------------------------------------------------------------
def recon_kernel(x_ref, w1_ref, b1_ref, w2_ref, b2_ref, w3_ref, b3_ref, o_ref):
    x = x_ref[...].astype(jnp.bfloat16)
    h1 = jnp.dot(x, w1_ref[...], preferred_element_type=jnp.float32)
    h1 = jnp.maximum(h1 + b1_ref[...], 0.0)
    h2 = jnp.dot(h1.astype(jnp.bfloat16), w2_ref[...], preferred_element_type=jnp.float32)
    h2 = jnp.maximum(h2 + b2_ref[...], 0.0)
    h3 = jnp.dot(h2.astype(jnp.bfloat16), w3_ref[...], preferred_element_type=jnp.float32)
    o_ref[...] = h3 + b3_ref[...]


def reconstruction_forward(x, params):
    """x: (B, 128) float32.  Returns (B, 4, 10, 10) float32 (NCHW)."""
    (w1, b1), (w2, b2), (w3, b3) = params
    B, Kin = x.shape
    Npad = w3.shape[1]

    # Batch tile: multiple of 8 sublanes, up to 128 rows per grid step.
    TB = min(128, -(-B // 8) * 8)
    B_pad = -(-B // TB) * TB
    if B_pad != B:
        x = jnp.pad(x, ((0, B_pad - B), (0, 0)))
    nb = B_pad // TB

    flops = 2 * B_pad * (w1.shape[0] * w1.shape[1]
                         + w2.shape[0] * w2.shape[1]
                         + w3.shape[0] * w3.shape[1])
    bytes_accessed = (
        B_pad * Kin * 4
        + sum(int(w.size) * 2 for w in (w1, w2, w3))   # bf16 weights
        + sum(int(b.size) * 4 for b in (b1, b2, b3))   # f32 biases
        + B_pad * Npad * 4                             # f32 output
    )

    out_flat = pl.pallas_call(
        recon_kernel,
        out_shape=jax.ShapeDtypeStruct((B_pad, Npad), jnp.float32),
        grid=(nb,),
        in_specs=[
            pl.BlockSpec((TB, Kin), lambda i: (i, 0)),
            pl.BlockSpec(w1.shape, lambda i: (0, 0)),
            pl.BlockSpec(b1.shape, lambda i: (0, 0)),
            pl.BlockSpec(w2.shape, lambda i: (0, 0)),
            pl.BlockSpec(b2.shape, lambda i: (0, 0)),
            pl.BlockSpec(w3.shape, lambda i: (0, 0)),
            pl.BlockSpec(b3.shape, lambda i: (0, 0)),
        ],
        out_specs=pl.BlockSpec((TB, Npad), lambda i: (i, 0)),
        compiler_params=pltpu.CompilerParams(
            dimension_semantics=("parallel",),
            vmem_limit_bytes=16 << 20,
        ),
        cost_estimate=pl.CostEstimate(
            flops=flops, transcendentals=0, bytes_accessed=bytes_accessed),
    )(x, w1, b1, w2, b2, w3, b3)

    return out_flat[:B, :OUT_REAL].reshape(B, 4, 10, 10)


def make_params(key, in_channels=128, num_channels=64):
    """Deterministic synthetic parameters with the shapes PyTorch would create,
    rewritten as (bf16) matmul matrices + (f32) bias rows."""
    ks = jax.random.split(key, 6)

    def init(k, shape, fan_in):
        bound = 1.0 / np.sqrt(fan_in)
        return np.asarray(jax.random.uniform(k, shape, jnp.float32, -bound, bound))

    # ConvTranspose2d weight layout: (Cin, Cout, K, K)
    W1 = init(ks[0], (in_channels, num_channels, 4, 4), num_channels * 16)
    b1 = init(ks[1], (num_channels,), num_channels * 16)
    W2 = init(ks[2], (num_channels, num_channels, 4, 4), num_channels * 16)
    b2 = init(ks[3], (num_channels,), num_channels * 16)
    W3 = init(ks[4], (num_channels, 4, 6, 6), 4 * 36)
    b3 = init(ks[5], (4,), 4 * 36)

    M1, bv1, H1, W1o = deconv_as_matmul(W1, b1, stride=2, pad=1, Hi=1, Wi=1)     # -> 2x2
    M2, bv2, H2, W2o = deconv_as_matmul(W2, b2, stride=2, pad=1, Hi=H1, Wi=W1o)  # -> 4x4
    M3, bv3, H3, W3o = deconv_as_matmul(W3, b3, stride=2, pad=1, Hi=H2, Wi=W2o)  # -> 10x10
    assert (H3, W3o) == (10, 10)

    # Lane-dense padding for layer 3: 400 -> 512 columns. Zero pad => padded
    # output columns are exactly 0 and get sliced away in the wrapper.
    M3p = np.zeros((M3.shape[0], OUT_PAD), np.float32)
    M3p[:, :OUT_REAL] = M3
    bv3p = np.zeros((OUT_PAD,), np.float32)
    bv3p[:OUT_REAL] = bv3

    wj = lambda a: jnp.asarray(a, jnp.bfloat16)                  # dot inputs: bf16
    bj = lambda a: jnp.asarray(a, jnp.float32).reshape(1, -1)    # bias rows: f32

    # TODO(synk): layer-3's dense lowering carries ~40-50% structural zeros; a
    # per-tap structured matmul would cut its bandwidth further.
    return ((wj(M1), bj(bv1)), (wj(M2), bj(bv2)), (wj(M3p), bj(bv3p)))


if __name__ == "__main__":
    key = jax.random.PRNGKey(0)
    pkey, xkey = jax.random.split(key)

    B, IN_CH = 4, 128
    params = make_params(pkey, in_channels=IN_CH, num_channels=64)
    x = jax.random.normal(xkey, (B, IN_CH), jnp.float32)

    out = jax.block_until_ready(reconstruction_forward(x, params))
    assert out.shape == (B, 4, 10, 10), out.shape
    assert bool(jnp.all(jnp.isfinite(out)))

    # Cross-check against a plain-JAX reference of the same bf16-weight math.
    (w1, b1), (w2, b2), (w3, b3) = params
    h = jnp.maximum(jnp.dot(x.astype(jnp.bfloat16), w1,
                            preferred_element_type=jnp.float32) + b1, 0.0)
    h = jnp.maximum(jnp.dot(h.astype(jnp.bfloat16), w2,
                            preferred_element_type=jnp.float32) + b2, 0.0)
    ref = (jnp.dot(h.astype(jnp.bfloat16), w3,
                   preferred_element_type=jnp.float32) + b3)[:, :OUT_REAL]
    ref = ref.reshape(B, 4, 10, 10)
    assert bool(jnp.allclose(out, ref, atol=5e-2, rtol=5e-2)), \
        float(jnp.max(jnp.abs(out - ref)))

    print("KERNEL_OK")
</pallas_src>

<mosaic_0001>
module attributes {stable_mosaic.version = 11 : i64} {
  func.func @recon_kernel(%arg0: i32, %arg1: memref<8x128xf32, #tpu.memory_space<vmem>>, %arg2: memref<128x256xbf16, #tpu.memory_space<vmem>>, %arg3: memref<1x256xf32, #tpu.memory_space<vmem>>, %arg4: memref<256x1024xbf16, #tpu.memory_space<vmem>>, %arg5: memref<1x1024xf32, #tpu.memory_space<vmem>>, %arg6: memref<1024x512xbf16, #tpu.memory_space<vmem>>, %arg7: memref<1x512xf32, #tpu.memory_space<vmem>>, %arg8: memref<8x512xf32, #tpu.memory_space<vmem>>) attributes {dimension_semantics = [#tpu.dimension_semantics<parallel>], iteration_bounds = array<i64: 1>, scalar_prefetch = 0 : i64, scratch_operands = 0 : i64, tpu.core_type = #tpu.core_type<tc>, window_params = [{transform_indices = @transform_0, window_bounds = array<i64: 8, 128>}, {pipeline_mode = #tpu.pipeline_mode<synchronous>, transform_indices = @transform_1, window_bounds = array<i64: 128, 256>}, {pipeline_mode = #tpu.pipeline_mode<synchronous>, transform_indices = @transform_2, window_bounds = array<i64: 1, 256>}, {pipeline_mode = #tpu.pipeline_mode<synchronous>, transform_indices = @transform_3, window_bounds = array<i64: 256, 1024>}, {pipeline_mode = #tpu.pipeline_mode<synchronous>, transform_indices = @transform_4, window_bounds = array<i64: 1, 1024>}, {pipeline_mode = #tpu.pipeline_mode<synchronous>, transform_indices = @transform_5, window_bounds = array<i64: 1024, 512>}, {pipeline_mode = #tpu.pipeline_mode<synchronous>, transform_indices = @transform_6, window_bounds = array<i64: 1, 512>}, {transform_indices = @transform_7, window_bounds = array<i64: 8, 512>}]} {
    %c0 = arith.constant 0 : index
    %c0_0 = arith.constant 0 : index
    %0 = vector.load %arg1[%c0, %c0_0] : memref<8x128xf32, #tpu.memory_space<vmem>>, vector<8x128xf32>
    %1 = arith.truncf %0 : vector<8x128xf32> to vector<8x128xbf16>
    %c0_1 = arith.constant 0 : index
    %c0_2 = arith.constant 0 : index
    %2 = vector.load %arg2[%c0_1, %c0_2] : memref<128x256xbf16, #tpu.memory_space<vmem>>, vector<128x256xbf16>
    %cst = arith.constant dense<0.000000e+00> : vector<8x256xf32>
    %3 = tpu.matmul %1, %2, %cst {dimension_numbers = #tpu.dot_dimension_numbers<[1], [0], [0], [1], [0, 0, 1, 1], [], []>} : vector<8x128xbf16>, vector<128x256xbf16>, vector<8x256xf32> -> vector<8x256xf32>
    %c0_3 = arith.constant 0 : index
    %c0_4 = arith.constant 0 : index
    %4 = vector.load %arg3[%c0_3, %c0_4] : memref<1x256xf32, #tpu.memory_space<vmem>>, vector<1x256xf32>
    %5 = vector.broadcast %4 : vector<1x256xf32> to vector<8x256xf32>
    %6 = arith.addf %3, %5 : vector<8x256xf32>
    %cst_5 = arith.constant 0.000000e+00 : f32
    %7 = vector.broadcast %cst_5 : f32 to vector<8x256xf32>
    %8 = arith.maximumf %6, %7 : vector<8x256xf32>
    %9 = arith.truncf %8 : vector<8x256xf32> to vector<8x256xbf16>
    %c0_6 = arith.constant 0 : index
    %c0_7 = arith.constant 0 : index
    %10 = vector.load %arg4[%c0_6, %c0_7] : memref<256x1024xbf16, #tpu.memory_space<vmem>>, vector<256x1024xbf16>
    %cst_8 = arith.constant dense<0.000000e+00> : vector<8x1024xf32>
    %11 = tpu.matmul %9, %10, %cst_8 {dimension_numbers = #tpu.dot_dimension_numbers<[1], [0], [0], [1], [0, 0, 1, 1], [], []>} : vector<8x256xbf16>, vector<256x1024xbf16>, vector<8x1024xf32> -> vector<8x1024xf32>
    %c0_9 = arith.constant 0 : index
    %c0_10 = arith.constant 0 : index
    %12 = vector.load %arg5[%c0_9, %c0_10] : memref<1x1024xf32, #tpu.memory_space<vmem>>, vector<1x1024xf32>
    %13 = vector.broadcast %12 : vector<1x1024xf32> to vector<8x1024xf32>
    %14 = arith.addf %11, %13 : vector<8x1024xf32>
    %cst_11 = arith.constant 0.000000e+00 : f32
    %15 = vector.broadcast %cst_11 : f32 to vector<8x1024xf32>
    %16 = arith.maximumf %14, %15 : vector<8x1024xf32>
    %17 = arith.truncf %16 : vector<8x1024xf32> to vector<8x1024xbf16>
    %c0_12 = arith.constant 0 : index
    %c0_13 = arith.constant 0 : index
    %18 = vector.load %arg6[%c0_12, %c0_13] : memref<1024x512xbf16, #tpu.memory_space<vmem>>, vector<1024x512xbf16>
    %cst_14 = arith.constant dense<0.000000e+00> : vector<8x512xf32>
    %19 = tpu.matmul %17, %18, %cst_14 {dimension_numbers = #tpu.dot_dimension_numbers<[1], [0], [0], [1], [0, 0, 1, 1], [], []>} : vector<8x1024xbf16>, vector<1024x512xbf16>, vector<8x512xf32> -> vector<8x512xf32>
    %c0_15 = arith.constant 0 : index
    %c0_16 = arith.constant 0 : index
    %20 = vector.load %arg7[%c0_15, %c0_16] : memref<1x512xf32, #tpu.memory_space<vmem>>, vector<1x512xf32>
    %21 = vector.broadcast %20 : vector<1x512xf32> to vector<8x512xf32>
    %22 = arith.addf %19, %21 : vector<8x512xf32>
    %c0_17 = arith.constant 0 : index
    %c0_18 = arith.constant 0 : index
    %23 = vector.load %arg8[%c0_17, %c0_18] : memref<8x512xf32, #tpu.memory_space<vmem>>, vector<8x512xf32>
    tpu.vector_store %arg8[%c0_17, %c0_18], %22 {strides = array<i32>} : memref<8x512xf32, #tpu.memory_space<vmem>>, vector<8x512xf32>,
    return
  }
  func.func @transform_0(%arg0: i32) -> (i32, i32) {
    %c0_i32 = arith.constant 0 : i32
    %c0_i32_0 = arith.constant 0 : i32
    return %arg0, %c0_i32 : i32, i32
  }
  func.func @transform_1(%arg0: i32) -> (i32, i32) {
    %c0_i32 = arith.constant 0 : i32
    %c0_i32_0 = arith.constant 0 : i32
    %c0_i32_1 = arith.constant 0 : i32
    return %c0_i32, %c0_i32_0 : i32, i32
  }
  func.func @transform_2(%arg0: i32) -> (i32, i32) {
    %c0_i32 = arith.constant 0 : i32
    %c0_i32_0 = arith.constant 0 : i32
    %c0_i32_1 = arith.constant 0 : i32
    return %c0_i32, %c0_i32_0 : i32, i32
  }
  func.func @transform_3(%arg0: i32) -> (i32, i32) {
    %c0_i32 = arith.constant 0 : i32
    %c0_i32_0 = arith.constant 0 : i32
    %c0_i32_1 = arith.constant 0 : i32
    return %c0_i32, %c0_i32_0 : i32, i32
  }
  func.func @transform_4(%arg0: i32) -> (i32, i32) {
    %c0_i32 = arith.constant 0 : i32
    %c0_i32_0 = arith.constant 0 : i32
    %c0_i32_1 = arith.constant 0 : i32
    return %c0_i32, %c0_i32_0 : i32, i32
  }
  func.func @transform_5(%arg0: i32) -> (i32, i32) {
    %c0_i32 = arith.constant 0 : i32
    %c0_i32_0 = arith.constant 0 : i32
    %c0_i32_1 = arith.constant 0 : i32
    return %c0_i32, %c0_i32_0 : i32, i32
  }
  func.func @transform_6(%arg0: i32) -> (i32, i32) {
    %c0_i32 = arith.constant 0 : i32
    %c0_i32_0 = arith.constant 0 : i32
    %c0_i32_1 = arith.constant 0 : i32
    return %c0_i32, %c0_i32_0 : i32, i32
  }
  func.func @transform_7(%arg0: i32) -> (i32, i32) {
    %c0_i32 = arith.constant 0 : i32
    %c0_i32_0 = arith.constant 0 : i32
    return %arg0, %c0_i32 : i32, i32
  }
}

</mosaic_0001>

<llo_original>
// kernel: tpu_custom_call.1
$region0: #{tpu_custom_call.1}
  #allocation0 [shape = 'u32[]', space=smem, size = 0x4, offset = 0x4, fixed_abs, tag = 'smem constant byte address 0x4 - core index']
  #allocation1 [shape = 'u32[72,128]{1,0:T(1,128)}', space=vmem, size = 0x9000, scoped, tag = 'internal scratch']
  %s0 = inlined_call_operand.hbm [shape: f32[8,128], index: 0, kind: input, shape index: {}]
  %s1 = inlined_call_operand.hbm [shape: bf16[128,256], index: 1, kind: input, shape index: {}]
  %s2 = inlined_call_operand.hbm [shape: f32[1,256], index: 2, kind: input, shape index: {}]
  %s3 = inlined_call_operand.hbm [shape: bf16[256,1024], index: 3, kind: input, shape index: {}]
  %s4 = inlined_call_operand.hbm [shape: f32[1,1024], index: 4, kind: input, shape index: {}]
  %s5 = inlined_call_operand.hbm [shape: bf16[1024,512], index: 5, kind: input, shape index: {}]
  %s6 = inlined_call_operand.vmem [shape: f32[1,512], index: 6, kind: input, shape index: {}]
  %s7 = inlined_call_operand.hbm [shape: f32[8,512], index: 7, kind: output, shape index: {}]
  %s8 = sld [smem:[#allocation0]]
  $region62: #{tpu_custom_call.1} parent=0
    _
  %s10 = ssub.s32 1, %s8
  %s11 = scalar_select 0, %s10, %s8
  $region1: #{tpu_custom_call.1} parent=0
    #allocation2 [shape = 'u8[4096]{0}', space=vmem, size = 0x1000, scoped, tag = 'input window, operand 0, single buffered']
    #allocation3 [shape = 's32[1]{0}', space=sflag, size = 0x4, scoped, tag = 'scoped memory for tpu_custom_call.1']
    #allocation4 [shape = 's32[1]{0}', space=sflag, size = 0x4, scoped, tag = 'scoped memory for tpu_custom_call.1']
    #allocation5 [shape = 'u8[65536]{0}', space=vmem, size = 0x10000, scoped, tag = 'input window, operand 1, single buffered']
    #allocation6 [shape = 's32[1]{0}', space=sflag, size = 0x4, scoped, tag = 'scoped memory for tpu_custom_call.1']
    #allocation7 [shape = 'u8[1024]{0}', space=vmem, size = 0x400, scoped, tag = 'input window, operand 2, single buffered']
    #allocation8 [shape = 'u8[524288]{0}', space=vmem, size = 0x80000, scoped, tag = 'input window, operand 3, single buffered']
    #allocation9 [shape = 's32[1]{0}', space=sflag, size = 0x4, scoped, tag = 'scoped memory for tpu_custom_call.1']
    #allocation10 [shape = 'u8[4096]{0}', space=vmem, size = 0x1000, scoped, tag = 'input window, operand 4, single buffered']
    #allocation11 [shape = 'u8[1048576]{0}', space=vmem, size = 0x100000, scoped, tag = 'input window, operand 5, single buffered']
    #allocation12 [shape = 's32[1]{0}', space=sflag, size = 0x4, scoped, tag = 'scoped memory for tpu_custom_call.1']
    #allocation13 [shape = 'u8[16384]{0}', space=vmem, size = 0x4000, scoped, tag = 'output window, operand 0, single buffered']
    %12 = vsyncpa [#allocation3], 0
    %13 = vsyncpa [#allocation6], 0
    %14 = vsyncpa [#allocation9], 0
    %15 = vsyncpa [#allocation12], 0
    %16 = vsyncpa [#allocation4], 0
    // Predicated region
    $region2: #{tpu_custom_call.1} parent=1 // pred_check
      _
    $region3: #{tpu_custom_call.1} parent=1 // pred_check_branch
      %18 = sbr.rel (0) target = $region5
    $region4: #{tpu_custom_call.1} parent=1 // pred_region
      %20 = vsyncadd [#allocation3], 0
      %s22 = sshll.u32 %s0, 4
      %s23 = int_to_ptr.hbm [resolvable:$true] %s22
      %s24 = sshll.u32 [#allocation2], 4
      %s25 = int_to_ptr.vmem [resolvable:$true] %s24
      %27 = dma.hbm_to_vmem [thread:$0]  %s23, 128, %s25, [#allocation3]
    $region5: #{tpu_custom_call.1} parent=1 // pred_fallthru
      _
    // Predicated region
    $region6: #{tpu_custom_call.1} parent=1 // pred_check
      _
    $region7: #{tpu_custom_call.1} parent=1 // pred_check_branch
      %29 = sbr.rel (0) target = $region9
    $region8: #{tpu_custom_call.1} parent=1 // pred_region
      %31 = vsyncadd [#allocation6], 0
      %s32 = sshll.u32 %s1, 4
      %s33 = int_to_ptr.hbm [resolvable:$true] %s32
      %s34 = sshll.u32 [#allocation5], 4
      %s35 = int_to_ptr.vmem [resolvable:$true] %s34
      %40 = dma.hbm_to_vmem [thread:$0]  %s33, 2048, %s35, [#allocation6], 128, 128, 8
    $region9: #{tpu_custom_call.1} parent=1 // pred_fallthru
      _
    // Predicated region
    $region10: #{tpu_custom_call.1} parent=1 // pred_check
      _
    $region11: #{tpu_custom_call.1} parent=1 // pred_check_branch
      %42 = sbr.rel (0) target = $region13
    $region12: #{tpu_custom_call.1} parent=1 // pred_region
      %44 = vsyncadd [#allocation6], 0
      %s46 = sshll.u32 %s2, 4
      %s47 = int_to_ptr.hbm [resolvable:$true] %s46
      %s48 = sshll.u32 [#allocation7], 4
      %s49 = int_to_ptr.vmem [resolvable:$true] %s48
      %51 = dma.hbm_to_vmem [thread:$0]  %s47, 32, %s49, [#allocation6]
    $region13: #{tpu_custom_call.1} parent=1 // pred_fallthru
      _
    // Predicated region
    $region14: #{tpu_custom_call.1} parent=1 // pred_check
      _
    $region15: #{tpu_custom_call.1} parent=1 // pred_check_branch
      %53 = sbr.rel (0) target = $region17
    $region16: #{tpu_custom_call.1} parent=1 // pred_region
      %55 = vsyncadd [#allocation9], 0
      %s56 = sshll.u32 %s3, 4
      %s57 = int_to_ptr.hbm [resolvable:$true] %s56
      %s58 = sshll.u32 [#allocation8], 4
      %s59 = int_to_ptr.vmem [resolvable:$true] %s58
      %64 = dma.hbm_to_vmem [thread:$0]  %s57, 16384, %s59, [#allocation9], 512, 512, 32
    $region17: #{tpu_custom_call.1} parent=1 // pred_fallthru
      _
    // Predicated region
    $region18: #{tpu_custom_call.1} parent=1 // pred_check
      _
    $region19: #{tpu_custom_call.1} parent=1 // pred_check_branch
      %66 = sbr.rel (0) target = $region21
    $region20: #{tpu_custom_call.1} parent=1 // pred_region
      %68 = vsyncadd [#allocation9], 0
      %s70 = sshll.u32 %s4, 4
      %s71 = int_to_ptr.hbm [resolvable:$true] %s70
      %s72 = sshll.u32 [#allocation10], 4
      %s73 = int_to_ptr.vmem [resolvable:$true] %s72
      %75 = dma.hbm_to_vmem [thread:$0]  %s71, 128, %s73, [#allocation9]
    $region21: #{tpu_custom_call.1} parent=1 // pred_fallthru
      _
    // Predicated region
    $region22: #{tpu_custom_call.1} parent=1 // pred_check
      _
    $region23: #{tpu_custom_call.1} parent=1 // pred_check_branch
      %77 = sbr.rel (0) target = $region25
    $region24: #{tpu_custom_call.1} parent=1 // pred_region
      %79 = vsyncadd [#allocation12], 0
      %s80 = sshll.u32 %s5, 4
      %s81 = int_to_ptr.hbm [resolvable:$true] %s80
      %s82 = sshll.u32 [#allocation11], 4
      %s83 = int_to_ptr.vmem [resolvable:$true] %s82
      %88 = dma.hbm_to_vmem [thread:$0]  %s81, 32768, %s83, [#allocation12], 256, 256, 16
    $region25: #{tpu_custom_call.1} parent=1 // pred_fallthru
      _
    // Predicated region
    $region26: #{tpu_custom_call.1} parent=1 // pred_check
      _
    $region27: #{tpu_custom_call.1} parent=1 // pred_check_branch
      %90 = sbr.rel (0) target = $region29
    $region28: #{tpu_custom_call.1} parent=1 // pred_region
      _
    $region29: #{tpu_custom_call.1} parent=1 // pred_fallthru
      _
    // Predicated region
    $region30: #{tpu_custom_call.1} parent=1 // pred_check
      _
    $region31: #{tpu_custom_call.1} parent=1 // pred_check_branch
      %92 = sbr.rel (0) target = $region33
    $region32: #{tpu_custom_call.1} parent=1 // pred_region
      %94 = dma.done [#allocation3], 128
    $region33: #{tpu_custom_call.1} parent=1 // pred_fallthru
      _
    // Predicated region
    $region34: #{tpu_custom_call.1} parent=1 // pred_check
      _
    $region35: #{tpu_custom_call.1} parent=1 // pred_check_branch
      %96 = sbr.rel (0) target = $region37
    $region36: #{tpu_custom_call.1} parent=1 // pred_region
      %98 = dma.done [#allocation6], 2048
    $region37: #{tpu_custom_call.1} parent=1 // pred_fallthru
      _
    // Predicated region
    $region38: #{tpu_custom_call.1} parent=1 // pred_check
      _
    $region39: #{tpu_custom_call.1} parent=1 // pred_check_branch
      %100 = sbr.rel (0) target = $region41
    $region40: #{tpu_custom_call.1} parent=1 // pred_region
      %102 = dma.done [#allocation6], 32
    $region41: #{tpu_custom_call.1} parent=1 // pred_fallthru
      _
    // Predicated region
    $region42: #{tpu_custom_call.1} parent=1 // pred_check
      _
    $region43: #{tpu_custom_call.1} parent=1 // pred_check_branch
      %104 = sbr.rel (0) target = $region45
    $region44: #{tpu_custom_call.1} parent=1 // pred_region
      %106 = dma.done [#allocation9], 16384
    $region45: #{tpu_custom_call.1} parent=1 // pred_fallthru
      _
    // Predicated region
    $region46: #{tpu_custom_call.1} parent=1 // pred_check
      _
    $region47: #{tpu_custom_call.1} parent=1 // pred_check_branch
      %108 = sbr.rel (0) target = $region49
    $region48: #{tpu_custom_call.1} parent=1 // pred_region
      %110 = dma.done [#allocation9], 128
    $region49: #{tpu_custom_call.1} parent=1 // pred_fallthru
      _
    // Predicated region
    $region50: #{tpu_custom_call.1} parent=1 // pred_check
      _
    $region51: #{tpu_custom_call.1} parent=1 // pred_check_branch
      %112 = sbr.rel (0) target = $region53
    $region52: #{tpu_custom_call.1} parent=1 // pred_region
      %114 = dma.done [#allocation12], 32768
    $region53: #{tpu_custom_call.1} parent=1 // pred_fallthru
      _
    %v115 = vld [vmem:[#allocation2] sm:$0xff]
    %v116 = vpack.c.bf16 %v115, %v115
    %v117 = vld [vmem:[#allocation5] sm:$0xff]
    %v118 = vld [vmem:[#allocation5 + $0x8] sm:$0xff]
    %v119 = vld [vmem:[#allocation5 + $0x10] sm:$0xff]
    %v120 = vld [vmem:[#allocation5 + $0x18] sm:$0xff]
    %v121 = vld [vmem:[#allocation5 + $0x20] sm:$0xff]
    %v122 = vld [vmem:[#allocation5 + $0x28] sm:$0xff]
    %v123 = vld [vmem:[#allocation5 + $0x30] sm:$0xff]
    %v124 = vld [vmem:[#allocation5 + $0x38] sm:$0xff]
    %v125 = vld [vmem:[#allocation5 + $0x40] sm:$0xff]
    %v126 = vld [vmem:[#allocation5 + $0x48] sm:$0xff]
    %v127 = vld [vmem:[#allocation5 + $0x50] sm:$0xff]
    %v128 = vld [vmem:[#allocation5 + $0x58] sm:$0xff]
    %v129 = vld [vmem:[#allocation5 + $0x60] sm:$0xff]
    %v130 = vld [vmem:[#allocation5 + $0x68] sm:$0xff]
    %v131 = vld [vmem:[#allocation5 + $0x70] sm:$0xff]
    %v132 = vld [vmem:[#allocation5 + $0x78] sm:$0xff]
    %v133 = vld [vmem:[#allocation7] sm:$0x3]
    %v135 = vperm.slane %v133, 0
    %v136 = vperm.slane %v133, 1
    %v155 = vunpack.c.l.b16 %v117
    %v156 = vunpack.c.h.b16 %v117
    %v157 = vunpack.c.l.b16 %v118
    %v158 = vunpack.c.h.b16 %v118
    %v159 = vunpack.c.l.b16 %v119
    %v160 = vunpack.c.h.b16 %v119
    %v161 = vunpack.c.l.b16 %v120
    %v162 = vunpack.c.h.b16 %v120
    %v163 = vunpack.c.l.b16 %v121
    %v164 = vunpack.c.h.b16 %v121
    %v165 = vunpack.c.l.b16 %v122
    %v166 = vunpack.c.h.b16 %v122
    %v167 = vunpack.c.l.b16 %v123
    %v168 = vunpack.c.h.b16 %v123
    %v169 = vunpack.c.l.b16 %v124
    %v170 = vunpack.c.h.b16 %v124
    %v171 = vunpack.c.l.b16 %v125
    %v172 = vunpack.c.h.b16 %v125
    %v173 = vunpack.c.l.b16 %v126
    %v174 = vunpack.c.h.b16 %v126
    %v175 = vunpack.c.l.b16 %v127
    %v176 = vunpack.c.h.b16 %v127
    %v177 = vunpack.c.l.b16 %v128
    %v178 = vunpack.c.h.b16 %v128
    %v179 = vunpack.c.l.b16 %v129
    %v180 = vunpack.c.h.b16 %v129
    %v181 = vunpack.c.l.b16 %v130
    %v182 = vunpack.c.h.b16 %v130
    %v183 = vunpack.c.l.b16 %v131
    %v184 = vunpack.c.h.b16 %v131
    %v185 = vunpack.c.l.b16 %v132
    %v186 = vunpack.c.h.b16 %v132
    %v187 = vpack.c.b16 %v157, %v155
    %v188 = vpack.c.b16 %v158, %v156
    %v189 = vpack.c.b16 %v161, %v159
    %v190 = vpack.c.b16 %v162, %v160
    %v191 = vpack.c.b16 %v165, %v163
    %v192 = vpack.c.b16 %v166, %v164
    %v193 = vpack.c.b16 %v169, %v167
    %v194 = vpack.c.b16 %v170, %v168
    %v195 = vpack.c.b16 %v173, %v171
    %v196 = vpack.c.b16 %v174, %v172
    %v197 = vpack.c.b16 %v177, %v175
    %v198 = vpack.c.b16 %v178, %v176
    %v199 = vpack.c.b16 %v181, %v179
    %v200 = vpack.c.b16 %v182, %v180
    %v201 = vpack.c.b16 %v185, %v183
    %v202 = vpack.c.b16 %v186, %v184
    %219 = vmatpush.bf16.msra.mxu0 %v201
    %220 = vmatpush.bf16.msra.mxu0 %v199
    %221 = vmatpush.bf16.msra.mxu0 %v197
    %222 = vmatpush.bf16.msra.mxu0 %v195
    %223 = vmatpush.bf16.msra.mxu0 %v193
    %224 = vmatpush.bf16.msra.mxu0 %v191
    %225 = vmatpush.bf16.msra.mxu0 %v189
    %226 = vmatpush.bf16.msra.mxu0 %v187
    %227 = vmatmul.bf16.gmra.mxu0 %v116
    %v228 = vpop.f32.mrf.mxu0
    %v229 = vadd.f32 %v135, %v228
    %v230 = vpop.f32.mrf.mxu0
    %231 = vdwg.mxu0
    %232 = vmatpush.bf16.msra.mxu0 %v202
    %233 = vmatpush.bf16.msra.mxu0 %v200
    %234 = vmatpush.bf16.msra.mxu0 %v198
    %235 = vmatpush.bf16.msra.mxu0 %v196
    %236 = vmatpush.bf16.msra.mxu0 %v194
    %237 = vmatpush.bf16.msra.mxu0 %v192
    %238 = vmatpush.bf16.msra.mxu0 %v190
    %239 = vmatpush.bf16.msra.mxu0 %v188
    %240 = vmatmul.bf16.gmra.mxu0 %v116
    %v241 = vpop.f32.mrf.mxu0
    %v242 = vadd.f32 %v136, %v241
    %v243 = vpop.f32.mrf.mxu0
    %244 = vdwg.mxu0
    %v245 = vmax.f32 %v229, 0.0
    %v246 = vmax.f32 %v242, 0.0
    %v247 = vpack.c.bf16 %v245, %v245
    %v248 = vpack.c.bf16 %v246, %v246
    %v249 = vld [vmem:[#allocation8] sm:$0xff]
    %v250 = vld [vmem:[#allocation8 + $0x8] sm:$0xff]
    %v251 = vld [vmem:[#allocation8 + $0x10] sm:$0xff]
    %v252 = vld [vmem:[#allocation8 + $0x18] sm:$0xff]
    %v253 = vld [vmem:[#allocation8 + $0x20] sm:$0xff]
    %v254 = vld [vmem:[#allocation8 + $0x28] sm:$0xff]
    %v255 = vld [vmem:[#allocation8 + $0x30] sm:$0xff]
    %v256 = vld [vmem:[#allocation8 + $0x38] sm:$0xff]
    %v257 = vld [vmem:[#allocation8 + $0x40] sm:$0xff]
    %v258 = vld [vmem:[#allocation8 + $0x48] sm:$0xff]
    %v259 = vld [vmem:[#allocation8 + $0x50] sm:$0xff]
    %v260 = vld [vmem:[#allocation8 + $0x58] sm:$0xff]
    %v261 = vld [vmem:[#allocation8 + $0x60] sm:$0xff]
    %v262 = vld [vmem:[#allocation8 + $0x68] sm:$0xff]
    %v263 = vld [vmem:[#allocation8 + $0x70] sm:$0xff]
    %v264 = vld [vmem:[#allocation8 + $0x78] sm:$0xff]
    %v265 = vld [vmem:[#allocation8 + $0x80] sm:$0xff]
    %v266 = vld [vmem:[#allocation8 + $0x88] sm:$0xff]
    %v267 = vld [vmem:[#allocation8 + $0x90] sm:$0xff]
    %v268 = vld [vmem:[#allocation8 + $0x98] sm:$0xff]
    %v269 = vld [vmem:[#allocation8 + $0xa0] sm:$0xff]
    %v270 = vld [vmem:[#allocation8 + $0xa8] sm:$0xff]
    %v271 = vld [vmem:[#allocation8 + $0xb0] sm:$0xff]
    %v272 = vld [vmem:[#allocation8 + $0xb8] sm:$0xff]
    %v273 = vld [vmem:[#allocation8 + $0xc0] sm:$0xff]
    %v274 = vld [vmem:[#allocation8 + $0xc8] sm:$0xff]
    %v275 = vld [vmem:[#allocation8 + $0xd0] sm:$0xff]
    %v276 = vld [vmem:[#allocation8 + $0xd8] sm:$0xff]
    %v277 = vld [vmem:[#allocation8 + $0xe0] sm:$0xff]
    %v278 = vld [vmem:[#allocation8 + $0xe8] sm:$0xff]
    %v279 = vld [vmem:[#allocation8 + $0xf0] sm:$0xff]
    %v280 = vld [vmem:[#allocation8 + $0xf8] sm:$0xff]
    %v281 = vld [vmem:[#allocation8 + $0x100] sm:$0xff]
    %v282 = vld [vmem:[#allocation8 + $0x108] sm:$0xff]
    %v283 = vld [vmem:[#allocation8 + $0x110] sm:$0xff]
    %v284 = vld [vmem:[#allocation8 + $0x118] sm:$0xff]
    %v285 = vld [vmem:[#allocation8 + $0x120] sm:$0xff]
    %v286 = vld [vmem:[#allocation8 + $0x128] sm:$0xff]
    %v287 = vld [vmem:[#allocation8 + $0x130] sm:$0xff]
    %v288 = vld [vmem:[#allocation8 + $0x138] sm:$0xff]
    %v289 = vld [vmem:[#allocation8 + $0x140] sm:$0xff]
    %v290 = vld [vmem:[#allocation8 + $0x148] sm:$0xff]
    %v291 = vld [vmem:[#allocation8 + $0x150] sm:$0xff]
    %v292 = vld [vmem:[#allocation8 + $0x158] sm:$0xff]
    %v293 = vld [vmem:[#allocation8 + $0x160] sm:$0xff]
    %v294 = vld [vmem:[#allocation8 + $0x168] sm:$0xff]
    %v295 = vld [vmem:[#allocation8 + $0x170] sm:$0xff]
    %v296 = vld [vmem:[#allocation8 + $0x178] sm:$0xff]
    %v297 = vld [vmem:[#allocation8 + $0x180] sm:$0xff]
    %v298 = vld [vmem:[#allocation8 + $0x188] sm:$0xff]
    %v299 = vld [vmem:[#allocation8 + $0x190] sm:$0xff]
    %v300 = vld [vmem:[#allocation8 + $0x198] sm:$0xff]
    %v301 = vld [vmem:[#allocation8 + $0x1a0] sm:$0xff]
    %v302 = vld [vmem:[#allocation8 + $0x1a8] sm:$0xff]
    %v303 = vld [vmem:[#allocation8 + $0x1b0] sm:$0xff]
    %v304 = vld [vmem:[#allocation8 + $0x1b8] sm:$0xff]
    %v305 = vld [vmem:[#allocation8 + $0x1c0] sm:$0xff]
    %v306 = vld [vmem:[#allocation8 + $0x1c8] sm:$0xff]
    %v307 = vld [vmem:[#allocation8 + $0x1d0] sm:$0xff]
    %v308 = vld [vmem:[#allocation8 + $0x1d8] sm:$0xff]
    %v309 = vld [vmem:[#allocation8 + $0x1e0] sm:$0xff]
    %v310 = vld [vmem:[#allocation8 + $0x1e8] sm:$0xff]
    %v311 = vld [vmem:[#allocation8 + $0x1f0] sm:$0xff]
    %v312 = vld [vmem:[#allocation8 + $0x1f8] sm:$0xff]
    %v313 = vld [vmem:[#allocation8 + $0x200] sm:$0xff]
    %v314 = vld [vmem:[#allocation8 + $0x208] sm:$0xff]
    %v315 = vld [vmem:[#allocation8 + $0x210] sm:$0xff]
    %v316 = vld [vmem:[#allocation8 + $0x218] sm:$0xff]
    %v317 = vld [vmem:[#allocation8 + $0x220] sm:$0xff]
    %v318 = vld [vmem:[#allocation8 + $0x228] sm:$0xff]
    %v319 = vld [vmem:[#allocation8 + $0x230] sm:$0xff]
    %v320 = vld [vmem:[#allocation8 + $0x238] sm:$0xff]
    %v321 = vld [vmem:[#allocation8 + $0x240] sm:$0xff]
    %v322 = vld [vmem:[#allocation8 + $0x248] sm:$0xff]
    %v323 = vld [vmem:[#allocation8 + $0x250] sm:$0xff]
    %v324 = vld [vmem:[#allocation8 + $0x258] sm:$0xff]
    %v325 = vld [vmem:[#allocation8 + $0x260] sm:$0xff]
    %v326 = vld [vmem:[#allocation8 + $0x268] sm:$0xff]
    %v327 = vld [vmem:[#allocation8 + $0x270] sm:$0xff]
    %v328 = vld [vmem:[#allocation8 + $0x278] sm:$0xff]
    %v329 = vld [vmem:[#allocation8 + $0x280] sm:$0xff]
    %v330 = vld [vmem:[#allocation8 + $0x288] sm:$0xff]
    %v331 = vld [vmem:[#allocation8 + $0x290] sm:$0xff]
    %v332 = vld [vmem:[#allocation8 + $0x298] sm:$0xff]
    %v333 = vld [vmem:[#allocation8 + $0x2a0] sm:$0xff]
    %v334 = vld [vmem:[#allocation8 + $0x2a8] sm:$0xff]
    %v335 = vld [vmem:[#allocation8 + $0x2b0] sm:$0xff]
    %v336 = vld [vmem:[#allocation8 + $0x2b8] sm:$0xff]
    %v337 = vld [vmem:[#allocation8 + $0x2c0] sm:$0xff]
    %v338 = vld [vmem:[#allocation8 + $0x2c8] sm:$0xff]
    %v339 = vld [vmem:[#allocation8 + $0x2d0] sm:$0xff]
    %v340 = vld [vmem:[#allocation8 + $0x2d8] sm:$0xff]
    %v341 = vld [vmem:[#allocation8 + $0x2e0] sm:$0xff]
    %v342 = vld [vmem:[#allocation8 + $0x2e8] sm:$0xff]
    %v343 = vld [vmem:[#allocation8 + $0x2f0] sm:$0xff]
    %v344 = vld [vmem:[#allocation8 + $0x2f8] sm:$0xff]
    %v345 = vld [vmem:[#allocation8 + $0x300] sm:$0xff]
    %v346 = vld [vmem:[#allocation8 + $0x308] sm:$0xff]
    %v347 = vld [vmem:[#allocation8 + $0x310] sm:$0xff]
    %v348 = vld [vmem:[#allocation8 + $0x318] sm:$0xff]
    %v349 = vld [vmem:[#allocation8 + $0x320] sm:$0xff]
    %v350 = vld [vmem:[#allocation8 + $0x328] sm:$0xff]
    %v351 = vld [vmem:[#allocation8 + $0x330] sm:$0xff]
    %v352 = vld [vmem:[#allocation8 + $0x338] sm:$0xff]
    %v353 = vld [vmem:[#allocation8 + $0x340] sm:$0xff]
    %v354 = vld [vmem:[#allocation8 + $0x348] sm:$0xff]
    %v355 = vld [vmem:[#allocation8 + $0x350] sm:$0xff]
    %v356 = vld [vmem:[#allocation8 + $0x358] sm:$0xff]
    %v357 = vld [vmem:[#allocation8 + $0x360] sm:$0xff]
    %v358 = vld [vmem:[#allocation8 + $0x368] sm:$0xff]
    %v359 = vld [vmem:[#allocation8 + $0x370] sm:$0xff]
    %v360 = vld [vmem:[#allocation8 + $0x378] sm:$0xff]
    %v361 = vld [vmem:[#allocation8 + $0x380] sm:$0xff]
    %v362 = vld [vmem:[#allocation8 + $0x388] sm:$0xff]
    %v363 = vld [vmem:[#allocation8 + $0x390] sm:$0xff]
    %v364 = vld [vmem:[#allocation8 + $0x398] sm:$0xff]
    %v365 = vld [vmem:[#allocation8 + $0x3a0] sm:$0xff]
    %v366 = vld [vmem:[#allocation8 + $0x3a8] sm:$0xff]
    %v367 = vld [vmem:[#allocation8 + $0x3b0] sm:$0xff]
    %v368 = vld [vmem:[#allocation8 + $0x3b8] sm:$0xff]
    %v369 = vld [vmem:[#allocation8 + $0x3c0] sm:$0xff]
    %v370 = vld [vmem:[#allocation8 + $0x3c8] sm:$0xff]
    %v371 = vld [vmem:[#allocation8 + $0x3d0] sm:$0xff]
    %v372 = vld [vmem:[#allocation8 + $0x3d8] sm:$0xff]
    %v373 = vld [vmem:[#allocation8 + $0x3e0] sm:$0xff]
    %v374 = vld [vmem:[#allocation8 + $0x3e8] sm:$0xff]
    %v375 = vld [vmem:[#allocation8 + $0x3f0] sm:$0xff]
    %v376 = vld [vmem:[#allocation8 + $0x3f8] sm:$0xff]
    %v377 = vld [vmem:[#allocation10] sm:$0xff]
    %v379 = vperm.slane %v377, 0
    %v380 = vperm.slane %v377, 1
    %v381 = vperm.slane %v377, 2
    %v382 = vperm.slane %v377, 3
    %v383 = vperm.slane %v377, 4
    %v384 = vperm.slane %v377, 5
    %v385 = vperm.slane %v377, 6
    %v386 = vperm.slane %v377, 7
    %v523 = vunpack.c.l.b16 %v249
    %v524 = vunpack.c.h.b16 %v249
    %v525 = vunpack.c.l.b16 %v250
    %v526 = vunpack.c.h.b16 %v250
    %v527 = vunpack.c.l.b16 %v251
    %v528 = vunpack.c.h.b16 %v251
    %v529 = vunpack.c.l.b16 %v252
    %v530 = vunpack.c.h.b16 %v252
    %v531 = vunpack.c.l.b16 %v253
    %v532 = vunpack.c.h.b16 %v253
    %v533 = vunpack.c.l.b16 %v254
    %v534 = vunpack.c.h.b16 %v254
    %v535 = vunpack.c.l.b16 %v255
    %v536 = vunpack.c.h.b16 %v255
    %v537 = vunpack.c.l.b16 %v256
    %v538 = vunpack.c.h.b16 %v256
    %v539 = vunpack.c.l.b16 %v257
    %v540 = vunpack.c.h.b16 %v257
    %v541 = vunpack.c.l.b16 %v258
    %v542 = vunpack.c.h.b16 %v258
    %v543 = vunpack.c.l.b16 %v259
    %v544 = vunpack.c.h.b16 %v259
    %v545 = vunpack.c.l.b16 %v260
    %v546 = vunpack.c.h.b16 %v260
    %v547 = vunpack.c.l.b16 %v261
    %v548 = vunpack.c.h.b16 %v261
    %v549 = vunpack.c.l.b16 %v262
    %v550 = vunpack.c.h.b16 %v262
    %v551 = vunpack.c.l.b16 %v263
    %v552 = vunpack.c.h.b16 %v263
    %v553 = vunpack.c.l.b16 %v264
    %v554 = vunpack.c.h.b16 %v264
    %v555 = vunpack.c.l.b16 %v265
    %v556 = vunpack.c.h.b16 %v265
    %v557 = vunpack.c.l.b16 %v266
    %v558 = vunpack.c.h.b16 %v266
    %v559 = vunpack.c.l.b16 %v267
    %v560 = vunpack.c.h.b16 %v267
    %v561 = vunpack.c.l.b16 %v268
    %v562 = vunpack.c.h.b16 %v268
    %v563 = vunpack.c.l.b16 %v269
    %v564 = vunpack.c.h.b16 %v269
    %v565 = vunpack.c.l.b16 %v270
    %v566 = vunpack.c.h.b16 %v270
    %v567 = vunpack.c.l.b16 %v271
    %v568 = vunpack.c.h.b16 %v271
    %v569 = vunpack.c.l.b16 %v272
    %v570 = vunpack.c.h.b16 %v272
    %v571 = vunpack.c.l.b16 %v273
    %v572 = vunpack.c.h.b16 %v273
    %v573 = vunpack.c.l.b16 %v274
    %v574 = vunpack.c.h.b16 %v274
    %v575 = vunpack.c.l.b16 %v275
    %v576 = vunpack.c.h.b16 %v275
    %v577 = vunpack.c.l.b16 %v276
    %v578 = vunpack.c.h.b16 %v276
    %v579 = vunpack.c.l.b16 %v277
    %v580 = vunpack.c.h.b16 %v277
    %v581 = vunpack.c.l.b16 %v278
    %v582 = vunpack.c.h.b16 %v278
    %v583 = vunpack.c.l.b16 %v279
    %v584 = vunpack.c.h.b16 %v279
    %v585 = vunpack.c.l.b16 %v280
    %v586 = vunpack.c.h.b16 %v280
    %v587 = vunpack.c.l.b16 %v281
    %v588 = vunpack.c.h.b16 %v281
    %v589 = vunpack.c.l.b16 %v282
    %v590 = vunpack.c.h.b16 %v282
    %v591 = vunpack.c.l.b16 %v283
    %v592 = vunpack.c.h.b16 %v283
    %v593 = vunpack.c.l.b16 %v284
    %v594 = vunpack.c.h.b16 %v284
    %v595 = vunpack.c.l.b16 %v285
    %v596 = vunpack.c.h.b16 %v285
    %v597 = vunpack.c.l.b16 %v286
    %v598 = vunpack.c.h.b16 %v286
    %v599 = vunpack.c.l.b16 %v287
    %v600 = vunpack.c.h.b16 %v287
    %v601 = vunpack.c.l.b16 %v288
    %v602 = vunpack.c.h.b16 %v288
    %v603 = vunpack.c.l.b16 %v289
    %v604 = vunpack.c.h.b16 %v289
    %v605 = vunpack.c.l.b16 %v290
    %v606 = vunpack.c.h.b16 %v290
    %v607 = vunpack.c.l.b16 %v291
    %v608 = vunpack.c.h.b16 %v291
    %v609 = vunpack.c.l.b16 %v292
    %v610 = vunpack.c.h.b16 %v292
    %v611 = vunpack.c.l.b16 %v293
    %v612 = vunpack.c.h.b16 %v293
    %v613 = vunpack.c.l.b16 %v294
    %v614 = vunpack.c.h.b16 %v294
    %v615 = vunpack.c.l.b16 %v295
    %v616 = vunpack.c.h.b16 %v295
    %v617 = vunpack.c.l.b16 %v296
    %v618 = vunpack.c.h.b16 %v296
    %v619 = vunpack.c.l.b16 %v297
    %v620 = vunpack.c.h.b16 %v297
    %v621 = vunpack.c.l.b16 %v298
    %v622 = vunpack.c.h.b16 %v298
    %v623 = vunpack.c.l.b16 %v299
    %v624 = vunpack.c.h.b16 %v299
    %v625 = vunpack.c.l.b16 %v300
    %v626 = vunpack.c.h.b16 %v300
    %v627 = vunpack.c.l.b16 %v301
    %v628 = vunpack.c.h.b16 %v301
    %v629 = vunpack.c.l.b16 %v302
    %v630 = vunpack.c.h.b16 %v302
    %v631 = vunpack.c.l.b16 %v303
    %v632 = vunpack.c.h.b16 %v303
    %v633 = vunpack.c.l.b16 %v304
    %v634 = vunpack.c.h.b16 %v304
    %v635 = vunpack.c.l.b16 %v305
    %v636 = vunpack.c.h.b16 %v305
    %v637 = vunpack.c.l.b16 %v306
    %v638 = vunpack.c.h.b16 %v306
    %v639 = vunpack.c.l.b16 %v307
    %v640 = vunpack.c.h.b16 %v307
    %v641 = vunpack.c.l.b16 %v308
    %v642 = vunpack.c.h.b16 %v308
    %v643 = vunpack.c.l.b16 %v309
    %v644 = vunpack.c.h.b16 %v309
    %v645 = vunpack.c.l.b16 %v310
    %v646 = vunpack.c.h.b16 %v310
    %v647 = vunpack.c.l.b16 %v311
    %v648 = vunpack.c.h.b16 %v311
    %v649 = vunpack.c.l.b16 %v312
    %v650 = vunpack.c.h.b16 %v312
    %v651 = vunpack.c.l.b16 %v313
    %v652 = vunpack.c.h.b16 %v313
    %v653 = vunpack.c.l.b16 %v314
    %v654 = vunpack.c.h.b16 %v314
    %v655 = vunpack.c.l.b16 %v315
    %v656 = vunpack.c.h.b16 %v315
    %v657 = vunpack.c.l.b16 %v316
    %v658 = vunpack.c.h.b16 %v316
    %v659 = vunpack.c.l.b16 %v317
    %v660 = vunpack.c.h.b16 %v317
    %v661 = vunpack.c.l.b16 %v318
    %v662 = vunpack.c.h.b16 %v318
    %v663 = vunpack.c.l.b16 %v319
    %v664 = vunpack.c.h.b16 %v319
    %v665 = vunpack.c.l.b16 %v320
    %v666 = vunpack.c.h.b16 %v320
    %v667 = vunpack.c.l.b16 %v321
    %v668 = vunpack.c.h.b16 %v321
    %v669 = vunpack.c.l.b16 %v322
    %v670 = vunpack.c.h.b16 %v322
    %v671 = vunpack.c.l.b16 %v323
    %v672 = vunpack.c.h.b16 %v323
    %v673 = vunpack.c.l.b16 %v324
    %v674 = vunpack.c.h.b16 %v324
    %v675 = vunpack.c.l.b16 %v325
    %v676 = vunpack.c.h.b16 %v325
    %v677 = vunpack.c.l.b16 %v326
    %v678 = vunpack.c.h.b16 %v326
    %v679 = vunpack.c.l.b16 %v327
    %v680 = vunpack.c.h.b16 %v327
    %v681 = vunpack.c.l.b16 %v328
    %v682 = vunpack.c.h.b16 %v328
    %v683 = vunpack.c.l.b16 %v329
    %v684 = vunpack.c.h.b16 %v329
    %v685 = vunpack.c.l.b16 %v330
    %v686 = vunpack.c.h.b16 %v330
    %v687 = vunpack.c.l.b16 %v331
    %v688 = vunpack.c.h.b16 %v331
    %v689 = vunpack.c.l.b16 %v332
    %v690 = vunpack.c.h.b16 %v332
    %v691 = vunpack.c.l.b16 %v333
    %v692 = vunpack.c.h.b16 %v333
    %v693 = vunpack.c.l.b16 %v334
    %v694 = vunpack.c.h.b16 %v334
    %v695 = vunpack.c.l.b16 %v335
    %v696 = vunpack.c.h.b16 %v335
    %v697 = vunpack.c.l.b16 %v336
    %v698 = vunpack.c.h.b16 %v336
    %v699 = vunpack.c.l.b16 %v337
    %v700 = vunpack.c.h.b16 %v337
    %v701 = vunpack.c.l.b16 %v338
    %v702 = vunpack.c.h.b16 %v338
    %v703 = vunpack.c.l.b16 %v339
    %v704 = vunpack.c.h.b16 %v339
    %v705 = vunpack.c.l.b16 %v340
    %v706 = vunpack.c.h.b16 %v340
    %v707 = vunpack.c.l.b16 %v341
    %v708 = vunpack.c.h.b16 %v341
    %v709 = vunpack.c.l.b16 %v342
    %v710 = vunpack.c.h.b16 %v342
    %v711 = vunpack.c.l.b16 %v343
    %v712 = vunpack.c.h.b16 %v343
    %v713 = vunpack.c.l.b16 %v344
    %v714 = vunpack.c.h.b16 %v344
    %v715 = vunpack.c.l.b16 %v345
    %v716 = vunpack.c.h.b16 %v345
    %v717 = vunpack.c.l.b16 %v346
    %v718 = vunpack.c.h.b16 %v346
    %v719 = vunpack.c.l.b16 %v347
    %v720 = vunpack.c.h.b16 %v347
    %v721 = vunpack.c.l.b16 %v348
    %v722 = vunpack.c.h.b16 %v348
    %v723 = vunpack.c.l.b16 %v349
    %v724 = vunpack.c.h.b16 %v349
    %v725 = vunpack.c.l.b16 %v350
    %v726 = vunpack.c.h.b16 %v350
    %v727 = vunpack.c.l.b16 %v351
    %v728 = vunpack.c.h.b16 %v351
    %v729 = vunpack.c.l.b16 %v352
    %v730 = vunpack.c.h.b16 %v352
    %v731 = vunpack.c.l.b16 %v353
    %v732 = vunpack.c.h.b16 %v353
    %v733 = vunpack.c.l.b16 %v354
    %v734 = vunpack.c.h.b16 %v354
    %v735 = vunpack.c.l.b16 %v355
    %v736 = vunpack.c.h.b16 %v355
    %v737 = vunpack.c.l.b16 %v356
    %v738 = vunpack.c.h.b16 %v356
    %v739 = vunpack.c.l.b16 %v357
    %v740 = vunpack.c.h.b16 %v357
    %v741 = vunpack.c.l.b16 %v358
    %v742 = vunpack.c.h.b16 %v358
    %v743 = vunpack.c.l.b16 %v359
    %v744 = vunpack.c.h.b16 %v359
    %v745 = vunpack.c.l.b16 %v360
    %v746 = vunpack.c.h.b16 %v360
    %v747 = vunpack.c.l.b16 %v361
    %v748 = vunpack.c.h.b16 %v361
    %v749 = vunpack.c.l.b16 %v362
    %v750 = vunpack.c.h.b16 %v362
    %v751 = vunpack.c.l.b16 %v363
    %v752 = vunpack.c.h.b16 %v363
    %v753 = vunpack.c.l.b16 %v364
    %v754 = vunpack.c.h.b16 %v364
    %v755 = vunpack.c.l.b16 %v365
    %v756 = vunpack.c.h.b16 %v365
    %v757 = vunpack.c.l.b16 %v366
    %v758 = vunpack.c.h.b16 %v366
    %v759 = vunpack.c.l.b16 %v367
    %v760 = vunpack.c.h.b16 %v367
    %v761 = vunpack.c.l.b16 %v368
    %v762 = vunpack.c.h.b16 %v368
    %v763 = vunpack.c.l.b16 %v369
    %v764 = vunpack.c.h.b16 %v369
    %v765 = vunpack.c.l.b16 %v370
    %v766 = vunpack.c.h.b16 %v370
    %v767 = vunpack.c.l.b16 %v371
    %v768 = vunpack.c.h.b16 %v371
    %v769 = vunpack.c.l.b16 %v372
    %v770 = vunpack.c.h.b16 %v372
    %v771 = vunpack.c.l.b16 %v373
    %v772 = vunpack.c.h.b16 %v373
    %v773 = vunpack.c.l.b16 %v374
    %v774 = vunpack.c.h.b16 %v374
    %v775 = vunpack.c.l.b16 %v375
    %v776 = vunpack.c.h.b16 %v375
    %v777 = vunpack.c.l.b16 %v376
    %v778 = vunpack.c.h.b16 %v376
    %v779 = vpack.c.b16 %v531, %v523
    %v780 = vpack.c.b16 %v532, %v524
    %v781 = vpack.c.b16 %v533, %v525
    %v782 = vpack.c.b16 %v534, %v526
    %v783 = vpack.c.b16 %v535, %v527
    %v784 = vpack.c.b16 %v536, %v528
    %v785 = vpack.c.b16 %v537, %v529
    %v786 = vpack.c.b16 %v538, %v530
    %v787 = vpack.c.b16 %v547, %v539
    %v788 = vpack.c.b16 %v548, %v540
    %v789 = vpack.c.b16 %v549, %v541
    %v790 = vpack.c.b16 %v550, %v542
    %v791 = vpack.c.b16 %v551, %v543
    %v792 = vpack.c.b16 %v552, %v544
    %v793 = vpack.c.b16 %v553, %v545
    %v794 = vpack.c.b16 %v554, %v546
    %v795 = vpack.c.b16 %v563, %v555
    %v796 = vpack.c.b16 %v564, %v556
    %v797 = vpack.c.b16 %v565, %v557
    %v798 = vpack.c.b16 %v566, %v558
    %v799 = vpack.c.b16 %v567, %v559
    %v800 = vpack.c.b16 %v568, %v560
    %v801 = vpack.c.b16 %v569, %v561
    %v802 = vpack.c.b16 %v570, %v562
    %v803 = vpack.c.b16 %v579, %v571
    %v804 = vpack.c.b16 %v580, %v572
    %v805 = vpack.c.b16 %v581, %v573
    %v806 = vpack.c.b16 %v582, %v574
    %v807 = vpack.c.b16 %v583, %v575
    %v808 = vpack.c.b16 %v584, %v576
    %v809 = vpack.c.b16 %v585, %v577
    %v810 = vpack.c.b16 %v586, %v578
    %v811 = vpack.c.b16 %v595, %v587
    %v812 = vpack.c.b16 %v596, %v588
    %v813 = vpack.c.b16 %v597, %v589
    %v814 = vpack.c.b16 %v598, %v590
    %v815 = vpack.c.b16 %v599, %v591
    %v816 = vpack.c.b16 %v600, %v592
    %v817 = vpack.c.b16 %v601, %v593
    %v818 = vpack.c.b16 %v602, %v594
    %v819 = vpack.c.b16 %v611, %v603
    %v820 = vpack.c.b16 %v612, %v604
    %v821 = vpack.c.b16 %v613, %v605
    %v822 = vpack.c.b16 %v614, %v606
    %v823 = vpack.c.b16 %v615, %v607
    %v824 = vpack.c.b16 %v616, %v608
    %v825 = vpack.c.b16 %v617, %v609
    %v826 = vpack.c.b16 %v618, %v610
    %v827 = vpack.c.b16 %v627, %v619
    %v828 = vpack.c.b16 %v628, %v620
    %v829 = vpack.c.b16 %v629, %v621
    %v830 = vpack.c.b16 %v630, %v622
    %v831 = vpack.c.b16 %v631, %v623
    %v832 = vpack.c.b16 %v632, %v624
    %v833 = vpack.c.b16 %v633, %v625
    %v834 = vpack.c.b16 %v634, %v626
    %v835 = vpack.c.b16 %v643, %v635
    %v836 = vpack.c.b16 %v644, %v636
    %v837 = vpack.c.b16 %v645, %v637
    %v838 = vpack.c.b16 %v646, %v638
    %v839 = vpack.c.b16 %v647, %v639
    %v840 = vpack.c.b16 %v648, %v640
    %v841 = vpack.c.b16 %v649, %v641
    %v842 = vpack.c.b16 %v650, %v642
    %v843 = vpack.c.b16 %v659, %v651
    %v844 = vpack.c.b16 %v660, %v652
    %v845 = vpack.c.b16 %v661, %v653
    %v846 = vpack.c.b16 %v662, %v654
    %v847 = vpack.c.b16 %v663, %v655
    %v848 = vpack.c.b16 %v664, %v656
    %v849 = vpack.c.b16 %v665, %v657
    %v850 = vpack.c.b16 %v666, %v658
    %v851 = vpack.c.b16 %v675, %v667
    %v852 = vpack.c.b16 %v676, %v668
    %v853 = vpack.c.b16 %v677, %v669
    %v854 = vpack.c.b16 %v678, %v670
    %v855 = vpack.c.b16 %v679, %v671
    %v856 = vpack.c.b16 %v680, %v672
    %v857 = vpack.c.b16 %v681, %v673
    %v858 = vpack.c.b16 %v682, %v674
    %v859 = vpack.c.b16 %v691, %v683
    %v860 = vpack.c.b16 %v692, %v684
    %v861 = vpack.c.b16 %v693, %v685
    %v862 = vpack.c.b16 %v694, %v686
    %v863 = vpack.c.b16 %v695, %v687
    %v864 = vpack.c.b16 %v696, %v688
    %v865 = vpack.c.b16 %v697, %v689
    %v866 = vpack.c.b16 %v698, %v690
    %v867 = vpack.c.b16 %v707, %v699
    %v868 = vpack.c.b16 %v708, %v700
    %v869 = vpack.c.b16 %v709, %v701
    %v870 = vpack.c.b16 %v710, %v702
    %v871 = vpack.c.b16 %v711, %v703
    %v872 = vpack.c.b16 %v712, %v704
    %v873 = vpack.c.b16 %v713, %v705
    %v874 = vpack.c.b16 %v714, %v706
    %v875 = vpack.c.b16 %v723, %v715
    %v876 = vpack.c.b16 %v724, %v716
    %v877 = vpack.c.b16 %v725, %v717
    %v878 = vpack.c.b16 %v726, %v718
    %v879 = vpack.c.b16 %v727, %v719
    %v880 = vpack.c.b16 %v728, %v720
    %v881 = vpack.c.b16 %v729, %v721
    %v882 = vpack.c.b16 %v730, %v722
    %v883 = vpack.c.b16 %v739, %v731
    %v884 = vpack.c.b16 %v740, %v732
    %v885 = vpack.c.b16 %v741, %v733
    %v886 = vpack.c.b16 %v742, %v734
    %v887 = vpack.c.b16 %v743, %v735
    %v888 = vpack.c.b16 %v744, %v736
    %v889 = vpack.c.b16 %v745, %v737
    %v890 = vpack.c.b16 %v746, %v738
    %v891 = vpack.c.b16 %v755, %v747
    %v892 = vpack.c.b16 %v756, %v748
    %v893 = vpack.c.b16 %v757, %v749
    %v894 = vpack.c.b16 %v758, %v750
    %v895 = vpack.c.b16 %v759, %v751
    %v896 = vpack.c.b16 %v760, %v752
    %v897 = vpack.c.b16 %v761, %v753
    %v898 = vpack.c.b16 %v762, %v754
    %v899 = vpack.c.b16 %v771, %v763
    %v900 = vpack.c.b16 %v772, %v764
    %v901 = vpack.c.b16 %v773, %v765
    %v902 = vpack.c.b16 %v774, %v766
    %v903 = vpack.c.b16 %v775, %v767
    %v904 = vpack.c.b16 %v776, %v768
    %v905 = vpack.c.b16 %v777, %v769
    %v906 = vpack.c.b16 %v778, %v770
    %1035 = vmatpush.bf16.msra.mxu0 %v835
    %1036 = vmatpush.bf16.msra.mxu0 %v827
    %1037 = vmatpush.bf16.msra.mxu0 %v819
    %1038 = vmatpush.bf16.msra.mxu0 %v811
    %1039 = vmatpush.bf16.msra.mxu0 %v803
    %1040 = vmatpush.bf16.msra.mxu0 %v795
    %1041 = vmatpush.bf16.msra.mxu0 %v787
    %1042 = vmatpush.bf16.msra.mxu0 %v779
    %1043 = vmatmul.bf16.gmra.mxu0 %v247
    %v1044 = vpop.f32.mrf.mxu0
    %v1045 = vadd.f32 %v379, %v1044
    %v1046 = vpop.f32.mrf.mxu0
    %1047 = vdwg.mxu0
    %1048 = vmatpush.bf16.msra.mxu0 %v899
    %1049 = vmatpush.bf16.msra.mxu0 %v891
    %1050 = vmatpush.bf16.msra.mxu0 %v883
    %1051 = vmatpush.bf16.msra.mxu0 %v875
    %1052 = vmatpush.bf16.msra.mxu0 %v867
    %1053 = vmatpush.bf16.msra.mxu0 %v859
    %1054 = vmatpush.bf16.msra.mxu0 %v851
    %1055 = vmatpush.bf16.msra.mxu0 %v843
    %1056 = vmatmul.bf16.gmra.mxu0 %v248
    %v1057 = vpop.f32.mrf.mxu0
    %v1058 = vadd.f32 %v1045, %v1057
    %v1059 = vpop.f32.mrf.mxu0
    %1060 = vdwg.mxu0
    %1061 = vmatpush.bf16.msra.mxu0 %v836
    %1062 = vmatpush.bf16.msra.mxu0 %v828
    %1063 = vmatpush.bf16.msra.mxu0 %v820
    %1064 = vmatpush.bf16.msra.mxu0 %v812
    %1065 = vmatpush.bf16.msra.mxu0 %v804
    %1066 = vmatpush.bf16.msra.mxu0 %v796
    %1067 = vmatpush.bf16.msra.mxu0 %v788
    %1068 = vmatpush.bf16.msra.mxu0 %v780
    %1069 = vmatmul.bf16.gmra.mxu0 %v247
    %v1070 = vpop.f32.mrf.mxu0
    %v1071 = vadd.f32 %v380, %v1070
    %v1072 = vpop.f32.mrf.mxu0
    %1073 = vdwg.mxu0
    %1074 = vmatpush.bf16.msra.mxu0 %v900
    %1075 = vmatpush.bf16.msra.mxu0 %v892
    %1076 = vmatpush.bf16.msra.mxu0 %v884
    %1077 = vmatpush.bf16.msra.mxu0 %v876
    %1078 = vmatpush.bf16.msra.mxu0 %v868
    %1079 = vmatpush.bf16.msra.mxu0 %v860
    %1080 = vmatpush.bf16.msra.mxu0 %v852
    %1081 = vmatpush.bf16.msra.mxu0 %v844
    %1082 = vmatmul.bf16.gmra.mxu0 %v248
    %v1083 = vpop.f32.mrf.mxu0
    %v1084 = vadd.f32 %v1071, %v1083
    %v1085 = vpop.f32.mrf.mxu0
    %1086 = vdwg.mxu0
    %1087 = vmatpush.bf16.msra.mxu0 %v837
    %1088 = vmatpush.bf16.msra.mxu0 %v829
    %1089 = vmatpush.bf16.msra.mxu0 %v821
    %1090 = vmatpush.bf16.msra.mxu0 %v813
    %1091 = vmatpush.bf16.msra.mxu0 %v805
    %1092 = vmatpush.bf16.msra.mxu0 %v797
    %1093 = vmatpush.bf16.msra.mxu0 %v789
    %1094 = vmatpush.bf16.msra.mxu0 %v781
    %1095 = vmatmul.bf16.gmra.mxu0 %v247
    %v1096 = vpop.f32.mrf.mxu0
    %v1097 = vadd.f32 %v381, %v1096
    %v1098 = vpop.f32.mrf.mxu0
    %1099 = vdwg.mxu0
    %1100 = vmatpush.bf16.msra.mxu0 %v901
    %1101 = vmatpush.bf16.msra.mxu0 %v893
    %1102 = vmatpush.bf16.msra.mxu0 %v885
    %1103 = vmatpush.bf16.msra.mxu0 %v877
    %1104 = vmatpush.bf16.msra.mxu0 %v869
    %1105 = vmatpush.bf16.msra.mxu0 %v861
    %1106 = vmatpush.bf16.msra.mxu0 %v853
    %1107 = vmatpush.bf16.msra.mxu0 %v845
    %1108 = vmatmul.bf16.gmra.mxu0 %v248
    %v1109 = vpop.f32.mrf.mxu0
    %v1110 = vadd.f32 %v1097, %v1109
    %v1111 = vpop.f32.mrf.mxu0
    %1112 = vdwg.mxu0
    %1113 = vmatpush.bf16.msra.mxu0 %v838
    %1114 = vmatpush.bf16.msra.mxu0 %v830
    %1115 = vmatpush.bf16.msra.mxu0 %v822
    %1116 = vmatpush.bf16.msra.mxu0 %v814
    %1117 = vmatpush.bf16.msra.mxu0 %v806
    %1118 = vmatpush.bf16.msra.mxu0 %v798
    %1119 = vmatpush.bf16.msra.mxu0 %v790
    %1120 = vmatpush.bf16.msra.mxu0 %v782
    %1121 = vmatmul.bf16.gmra.mxu0 %v247
    %v1122 = vpop.f32.mrf.mxu0
    %v1123 = vadd.f32 %v382, %v1122
    %v1124 = vpop.f32.mrf.mxu0
    %1125 = vdwg.mxu0
    %1126 = vmatpush.bf16.msra.mxu0 %v902
    %1127 = vmatpush.bf16.msra.mxu0 %v894
    %1128 = vmatpush.bf16.msra.mxu0 %v886
    %1129 = vmatpush.bf16.msra.mxu0 %v878
    %1130 = vmatpush.bf16.msra.mxu0 %v870
    %1131 = vmatpush.bf16.msra.mxu0 %v862
    %1132 = vmatpush.bf16.msra.mxu0 %v854
    %1133 = vmatpush.bf16.msra.mxu0 %v846
    %1134 = vmatmul.bf16.gmra.mxu0 %v248
    %v1135 = vpop.f32.mrf.mxu0
    %v1136 = vadd.f32 %v1123, %v1135
    %v1137 = vpop.f32.mrf.mxu0
    %1138 = vdwg.mxu0
    %1139 = vmatpush.bf16.msra.mxu0 %v839
    %1140 = vmatpush.bf16.msra.mxu0 %v831
    %1141 = vmatpush.bf16.msra.mxu0 %v823
    %1142 = vmatpush.bf16.msra.mxu0 %v815
    %1143 = vmatpush.bf16.msra.mxu0 %v807
    %1144 = vmatpush.bf16.msra.mxu0 %v799
    %1145 = vmatpush.bf16.msra.mxu0 %v791
    %1146 = vmatpush.bf16.msra.mxu0 %v783
    %1147 = vmatmul.bf16.gmra.mxu0 %v247
    %v1148 = vpop.f32.mrf.mxu0
    %v1149 = vadd.f32 %v383, %v1148
    %v1150 = vpop.f32.mrf.mxu0
    %1151 = vdwg.mxu0
    %1152 = vmatpush.bf16.msra.mxu0 %v903
    %1153 = vmatpush.bf16.msra.mxu0 %v895
    %1154 = vmatpush.bf16.msra.mxu0 %v887
    %1155 = vmatpush.bf16.msra.mxu0 %v879
    %1156 = vmatpush.bf16.msra.mxu0 %v871
    %1157 = vmatpush.bf16.msra.mxu0 %v863
    %1158 = vmatpush.bf16.msra.mxu0 %v855
    %1159 = vmatpush.bf16.msra.mxu0 %v847
    %1160 = vmatmul.bf16.gmra.mxu0 %v248
    %v1161 = vpop.f32.mrf.mxu0
    %v1162 = vadd.f32 %v1149, %v1161
    %v1163 = vpop.f32.mrf.mxu0
    %1164 = vdwg.mxu0
    %1165 = vmatpush.bf16.msra.mxu0 %v840
    %1166 = vmatpush.bf16.msra.mxu0 %v832
    %1167 = vmatpush.bf16.msra.mxu0 %v824
    %1168 = vmatpush.bf16.msra.mxu0 %v816
    %1169 = vmatpush.bf16.msra.mxu0 %v808
    %1170 = vmatpush.bf16.msra.mxu0 %v800
    %1171 = vmatpush.bf16.msra.mxu0 %v792
    %1172 = vmatpush.bf16.msra.mxu0 %v784
    %1173 = vmatmul.bf16.gmra.mxu0 %v247
    %v1174 = vpop.f32.mrf.mxu0
    %v1175 = vadd.f32 %v384, %v1174
    %v1176 = vpop.f32.mrf.mxu0
    %1177 = vdwg.mxu0
    %1178 = vmatpush.bf16.msra.mxu0 %v904
    %1179 = vmatpush.bf16.msra.mxu0 %v896
    %1180 = vmatpush.bf16.msra.mxu0 %v888
    %1181 = vmatpush.bf16.msra.mxu0 %v880
    %1182 = vmatpush.bf16.msra.mxu0 %v872
    %1183 = vmatpush.bf16.msra.mxu0 %v864
    %1184 = vmatpush.bf16.msra.mxu0 %v856
    %1185 = vmatpush.bf16.msra.mxu0 %v848
    %1186 = vmatmul.bf16.gmra.mxu0 %v248
    %v1187 = vpop.f32.mrf.mxu0
    %v1188 = vadd.f32 %v1175, %v1187
    %v1189 = vpop.f32.mrf.mxu0
    %1190 = vdwg.mxu0
    %1191 = vmatpush.bf16.msra.mxu0 %v841
    %1192 = vmatpush.bf16.msra.mxu0 %v833
    %1193 = vmatpush.bf16.msra.mxu0 %v825
    %1194 = vmatpush.bf16.msra.mxu0 %v817
    %1195 = vmatpush.bf16.msra.mxu0 %v809
    %1196 = vmatpush.bf16.msra.mxu0 %v801
    %1197 = vmatpush.bf16.msra.mxu0 %v793
    %1198 = vmatpush.bf16.msra.mxu0 %v785
    %1199 = vmatmul.bf16.gmra.mxu0 %v247
    %v1200 = vpop.f32.mrf.mxu0
    %v1201 = vadd.f32 %v385, %v1200
    %v1202 = vpop.f32.mrf.mxu0
    %1203 = vdwg.mxu0
    %1204 = vmatpush.bf16.msra.mxu0 %v905
    %1205 = vmatpush.bf16.msra.mxu0 %v897
    %1206 = vmatpush.bf16.msra.mxu0 %v889
    %1207 = vmatpush.bf16.msra.mxu0 %v881
    %1208 = vmatpush.bf16.msra.mxu0 %v873
    %1209 = vmatpush.bf16.msra.mxu0 %v865
    %1210 = vmatpush.bf16.msra.mxu0 %v857
    %1211 = vmatpush.bf16.msra.mxu0 %v849
    %1212 = vmatmul.bf16.gmra.mxu0 %v248
    %v1213 = vpop.f32.mrf.mxu0
    %v1214 = vadd.f32 %v1201, %v1213
    %v1215 = vpop.f32.mrf.mxu0
    %1216 = vdwg.mxu0
    %1217 = vmatpush.bf16.msra.mxu0 %v842
    %1218 = vmatpush.bf16.msra.mxu0 %v834
    %1219 = vmatpush.bf16.msra.mxu0 %v826
    %1220 = vmatpush.bf16.msra.mxu0 %v818
    %1221 = vmatpush.bf16.msra.mxu0 %v810
    %1222 = vmatpush.bf16.msra.mxu0 %v802
    %1223 = vmatpush.bf16.msra.mxu0 %v794
    %1224 = vmatpush.bf16.msra.mxu0 %v786
    %1225 = vmatmul.bf16.gmra.mxu0 %v247
    %v1226 = vpop.f32.mrf.mxu0
    %v1227 = vadd.f32 %v386, %v1226
    %v1228 = vpop.f32.mrf.mxu0
    %1229 = vdwg.mxu0
    %1230 = vmatpush.bf16.msra.mxu0 %v906
    %1231 = vmatpush.bf16.msra.mxu0 %v898
    %1232 = vmatpush.bf16.msra.mxu0 %v890
    %1233 = vmatpush.bf16.msra.mxu0 %v882
    %1234 = vmatpush.bf16.msra.mxu0 %v874
    %1235 = vmatpush.bf16.msra.mxu0 %v866
    %1236 = vmatpush.bf16.msra.mxu0 %v858
    %1237 = vmatpush.bf16.msra.mxu0 %v850
    %1238 = vmatmul.bf16.gmra.mxu0 %v248
    %v1239 = vpop.f32.mrf.mxu0
    %v1240 = vadd.f32 %v1227, %v1239
    %v1241 = vpop.f32.mrf.mxu0
    %1242 = vdwg.mxu0
    %v1243 = vmax.f32 %v1058, 0.0
    %v1244 = vmax.f32 %v1084, 0.0
    %v1245 = vmax.f32 %v1110, 0.0
    %v1246 = vmax.f32 %v1136, 0.0
    %v1247 = vmax.f32 %v1162, 0.0
    %v1248 = vmax.f32 %v1188, 0.0
    %v1249 = vmax.f32 %v1214, 0.0
    %v1250 = vmax.f32 %v1240, 0.0
    %v1251 = vpack.c.bf16 %v1243, %v1243
    %v1252 = vpack.c.bf16 %v1244, %v1244
    %v1253 = vpack.c.bf16 %v1245, %v1245
    %v1254 = vpack.c.bf16 %v1246, %v1246
    %v1255 = vpack.c.bf16 %v1247, %v1247
    %v1256 = vpack.c.bf16 %v1248, %v1248
    %v1257 = vpack.c.bf16 %v1249, %v1249
    %v1258 = vpack.c.bf16 %v1250, %v1250
    %v1259 = vld [vmem:[#allocation11] sm:$0xff]
    %v1260 = vld [vmem:[#allocation11 + $0x8] sm:$0xff]
    %v1261 = vld [vmem:[#allocation11 + $0x10] sm:$0xff]
    %v1262 = vld [vmem:[#allocation11 + $0x18] sm:$0xff]
    %v1263 = vld [vmem:[#allocation11 + $0x20] sm:$0xff]
    %v1264 = vld [vmem:[#allocation11 + $0x28] sm:$0xff]
    %v1265 = vld [vmem:[#allocation11 + $0x30] sm:$0xff]
    %v1266 = vld [vmem:[#allocation11 + $0x38] sm:$0xff]
    %v1267 = vld [vmem:[#allocation11 + $0x40] sm:$0xff]
    %v1268 = vld [vmem:[#allocation11 + $0x48] sm:$0xff]
    %v1269 = vld [vmem:[#allocation11 + $0x50] sm:$0xff]
    %v1270 = vld [vmem:[#allocation11 + $0x58] sm:$0xff]
    %v1271 = vld [vmem:[#allocation11 + $0x60] sm:$0xff]
    %v1272 = vld [vmem:[#allocation11 + $0x68] sm:$0xff]
    %v1273 = vld [vmem:[#allocation11 + $0x70] sm:$0xff]
    %v1274 = vld [vmem:[#allocation11 + $0x78] sm:$0xff]
    %v1275 = vld [vmem:[#allocation11 + $0x80] sm:$0xff]
    %v1276 = vld [vmem:[#allocation11 + $0x88] sm:$0xff]
    %v1277 = vld [vmem:[#allocation11 + $0x90] sm:$0xff]
    %v1278 = vld [vmem:[#allocation11 + $0x98] sm:$0xff]
    %v1279 = vld [vmem:[#allocation11 + $0xa0] sm:$0xff]
    %v1280 = vld [vmem:[#allocation11 + $0xa8] sm:$0xff]
    %v1281 = vld [vmem:[#allocation11 + $0xb0] sm:$0xff]
    %v1282 = vld [vmem:[#allocation11 + $0xb8] sm:$0xff]
    %v1283 = vld [vmem:[#allocation11 + $0xc0] sm:$0xff]
    %v1284 = vld [vmem:[#allocation11 + $0xc8] sm:$0xff]
    %v1285 = vld [vmem:[#allocation11 + $0xd0] sm:$0xff]
    %v1286 = vld [vmem:[#allocation11 + $0xd8] sm:$0xff]
    %v1287 = vld [vmem:[#allocation11 + $0xe0] sm:$0xff]
    %v1288 = vld [vmem:[#allocation11 + $0xe8] sm:$0xff]
    %v1289 = vld [vmem:[#allocation11 + $0xf0] sm:$0xff]
    %v1290 = vld [vmem:[#allocation11 + $0xf8] sm:$0xff]
    %v1291 = vld [vmem:[#allocation11 + $0x100] sm:$0xff]
    %v1292 = vld [vmem:[#allocation11 + $0x108] sm:$0xff]
    %v1293 = vld [vmem:[#allocation11 + $0x110] sm:$0xff]
    %v1294 = vld [vmem:[#allocation11 + $0x118] sm:$0xff]
    %v1295 = vld [vmem:[#allocation11 + $0x120] sm:$0xff]
    %v1296 = vld [vmem:[#allocation11 + $0x128] sm:$0xff]
    %v1297 = vld [vmem:[#allocation11 + $0x130] sm:$0xff]
    %v1298 = vld [vmem:[#allocation11 + $0x138] sm:$0xff]
    %v1299 = vld [vmem:[#allocation11 + $0x140] sm:$0xff]
    %v1300 = vld [vmem:[#allocation11 + $0x148] sm:$0xff]
    %v1301 = vld [vmem:[#allocation11 + $0x150] sm:$0xff]
    %v1302 = vld [vmem:[#allocation11 + $0x158] sm:$0xff]
    %v1303 = vld [vmem:[#allocation11 + $0x160] sm:$0xff]
    %v1304 = vld [vmem:[#allocation11 + $0x168] sm:$0xff]
    %v1305 = vld [vmem:[#allocation11 + $0x170] sm:$0xff]
    %v1306 = vld [vmem:[#allocation11 + $0x178] sm:$0xff]
    %v1307 = vld [vmem:[#allocation11 + $0x180] sm:$0xff]
    %v1308 = vld [vmem:[#allocation11 + $0x188] sm:$0xff]
    %v1309 = vld [vmem:[#allocation11 + $0x190] sm:$0xff]
    %v1310 = vld [vmem:[#allocation11 + $0x198] sm:$0xff]
    %v1311 = vld [vmem:[#allocation11 + $0x1a0] sm:$0xff]
    %v1312 = vld [vmem:[#allocation11 + $0x1a8] sm:$0xff]
    %v1313 = vld [vmem:[#allocation11 + $0x1b0] sm:$0xff]
    %v1314 = vld [vmem:[#allocation11 + $0x1b8] sm:$0xff]
    %v1315 = vld [vmem:[#allocation11 + $0x1c0] sm:$0xff]
    %v1316 = vld [vmem:[#allocation11 + $0x1c8] sm:$0xff]
    %v1317 = vld [vmem:[#allocation11 + $0x1d0] sm:$0xff]
    %v1318 = vld [vmem:[#allocation11 + $0x1d8] sm:$0xff]
    %v1319 = vld [vmem:[#allocation11 + $0x1e0] sm:$0xff]
    %v1320 = vld [vmem:[#allocation11 + $0x1e8] sm:$0xff]
    %v1321 = vld [vmem:[#allocation11 + $0x1f0] sm:$0xff]
    %v1322 = vld [vmem:[#allocation11 + $0x1f8] sm:$0xff]
    %v1323 = vld [vmem:[#allocation11 + $0x200] sm:$0xff]
    %v1324 = vld [vmem:[#allocation11 + $0x208] sm:$0xff]
    %v1325 = vld [vmem:[#allocation11 + $0x210] sm:$0xff]
    %v1326 = vld [vmem:[#allocation11 + $0x218] sm:$0xff]
    %v1327 = vld [vmem:[#allocation11 + $0x220] sm:$0xff]
    %v1328 = vld [vmem:[#allocation11 + $0x228] sm:$0xff]
    %v1329 = vld [vmem:[#allocation11 + $0x230] sm:$0xff]
    %v1330 = vld [vmem:[#allocation11 + $0x238] sm:$0xff]
    %v1331 = vld [vmem:[#allocation11 + $0x240] sm:$0xff]
    %v1332 = vld [vmem:[#allocation11 + $0x248] sm:$0xff]
    %v1333 = vld [vmem:[#allocation11 + $0x250] sm:$0xff]
    %v1334 = vld [vmem:[#allocation11 + $0x258] sm:$0xff]
    %v1335 = vld [vmem:[#allocation11 + $0x260] sm:$0xff]
    %v1336 = vld [vmem:[#allocation11 + $0x268] sm:$0xff]
    %v1337 = vld [vmem:[#allocation11 + $0x270] sm:$0xff]
    %v1338 = vld [vmem:[#allocation11 + $0x278] sm:$0xff]
    %v1339 = vld [vmem:[#allocation11 + $0x280] sm:$0xff]
    %v1340 = vld [vmem:[#allocation11 + $0x288] sm:$0xff]
    %v1341 = vld [vmem:[#allocation11 + $0x290] sm:$0xff]
    %v1342 = vld [vmem:[#allocation11 + $0x298] sm:$0xff]
    %v1343 = vld [vmem:[#allocation11 + $0x2a0] sm:$0xff]
    %v1344 = vld [vmem:[#allocation11 + $0x2a8] sm:$0xff]
    %v1345 = vld [vmem:[#allocation11 + $0x2b0] sm:$0xff]
    %v1346 = vld [vmem:[#allocation11 + $0x2b8] sm:$0xff]
    %v1347 = vld [vmem:[#allocation11 + $0x2c0] sm:$0xff]
    %v1348 = vld [vmem:[#allocation11 + $0x2c8] sm:$0xff]
    %v1349 = vld [vmem:[#allocation11 + $0x2d0] sm:$0xff]
    %v1350 = vld [vmem:[#allocation11 + $0x2d8] sm:$0xff]
    %v1351 = vld [vmem:[#allocation11 + $0x2e0] sm:$0xff]
    %v1352 = vld [vmem:[#allocation11 + $0x2e8] sm:$0xff]
    %v1353 = vld [vmem:[#allocation11 + $0x2f0] sm:$0xff]
    %v1354 = vld [vmem:[#allocation11 + $0x2f8] sm:$0xff]
    %v1355 = vld [vmem:[#allocation11 + $0x300] sm:$0xff]
    %v1356 = vld [vmem:[#allocation11 + $0x308] sm:$0xff]
    %v1357 = vld [vmem:[#allocation11 + $0x310] sm:$0xff]
    %v1358 = vld [vmem:[#allocation11 + $0x318] sm:$0xff]
    %v1359 = vld [vmem:[#allocation11 + $0x320] sm:$0xff]
    %v1360 = vld [vmem:[#allocation11 + $0x328] sm:$0xff]
    %v1361 = vld [vmem:[#allocation11 + $0x330] sm:$0xff]
    %v1362 = vld [vmem:[#allocation11 + $0x338] sm:$0xff]
    %v1363 = vld [vmem:[#allocation11 + $0x340] sm:$0xff]
    %v1364 = vld [vmem:[#allocation11 + $0x348] sm:$0xff]
    %v1365 = vld [vmem:[#allocation11 + $0x350] sm:$0xff]
    %v1366 = vld [vmem:[#allocation11 + $0x358] sm:$0xff]
    %v1367 = vld [vmem:[#allocation11 + $0x360] sm:$0xff]
    %v1368 = vld [vmem:[#allocation11 + $0x368] sm:$0xff]
    %v1369 = vld [vmem:[#allocation11 + $0x370] sm:$0xff]
    %v1370 = vld [vmem:[#allocation11 + $0x378] sm:$0xff]
    %v1371 = vld [vmem:[#allocation11 + $0x380] sm:$0xff]
    %v1372 = vld [vmem:[#allocation11 + $0x388] sm:$0xff]
    %v1373 = vld [vmem:[#allocation11 + $0x390] sm:$0xff]
    %v1374 = vld [vmem:[#allocation11 + $0x398] sm:$0xff]
    %v1375 = vld [vmem:[#allocation11 + $0x3a0] sm:$0xff]
    %v1376 = vld [vmem:[#allocation11 + $0x3a8] sm:$0xff]
    %v1377 = vld [vmem:[#allocation11 + $0x3b0] sm:$0xff]
    %v1378 = vld [vmem:[#allocation11 + $0x3b8] sm:$0xff]
    %v1379 = vld [vmem:[#allocation11 + $0x3c0] sm:$0xff]
    %v1380 = vld [vmem:[#allocation11 + $0x3c8] sm:$0xff]
    %v1381 = vld [vmem:[#allocation11 + $0x3d0] sm:$0xff]
    %v1382 = vld [vmem:[#allocation11 + $0x3d8] sm:$0xff]
    %v1383 = vld [vmem:[#allocation11 + $0x3e0] sm:$0xff]
    %v1384 = vld [vmem:[#allocation11 + $0x3e8] sm:$0xff]
    %v1385 = vld [vmem:[#allocation11 + $0x3f0] sm:$0xff]
    %v1386 = vld [vmem:[#allocation11 + $0x3f8] sm:$0xff]
    %v1387 = vld [vmem:[#allocation11 + $0x400] sm:$0xff]
    %v1388 = vld [vmem:[#allocation11 + $0x408] sm:$0xff]
    %v1389 = vld [vmem:[#allocation11 + $0x410] sm:$0xff]
    %v1390 = vld [vmem:[#allocation11 + $0x418] sm:$0xff]
    %v1391 = vld [vmem:[#allocation11 + $0x420] sm:$0xff]
    %v1392 = vld [vmem:[#allocation11 + $0x428] sm:$0xff]
    %v1393 = vld [vmem:[#allocation11 + $0x430] sm:$0xff]
    %v1394 = vld [vmem:[#allocation11 + $0x438] sm:$0xff]
    %v1395 = vld [vmem:[#allocation11 + $0x440] sm:$0xff]
    %v1396 = vld [vmem:[#allocation11 + $0x448] sm:$0xff]
    %v1397 = vld [vmem:[#allocation11 + $0x450] sm:$0xff]
    %v1398 = vld [vmem:[#allocation11 + $0x458] sm:$0xff]
    %v1399 = vld [vmem:[#allocation11 + $0x460] sm:$0xff]
    %v1400 = vld [vmem:[#allocation11 + $0x468] sm:$0xff]
    %v1401 = vld [vmem:[#allocation11 + $0x470] sm:$0xff]
    %v1402 = vld [vmem:[#allocation11 + $0x478] sm:$0xff]
    %v1403 = vld [vmem:[#allocation11 + $0x480] sm:$0xff]
    %v1404 = vld [vmem:[#allocation11 + $0x488] sm:$0xff]
    %v1405 = vld [vmem:[#allocation11 + $0x490] sm:$0xff]
    %v1406 = vld [vmem:[#allocation11 + $0x498] sm:$0xff]
    %v1407 = vld [vmem:[#allocation11 + $0x4a0] sm:$0xff]
    %v1408 = vld [vmem:[#allocation11 + $0x4a8] sm:$0xff]
    %v1409 = vld [vmem:[#allocation11 + $0x4b0] sm:$0xff]
    %v1410 = vld [vmem:[#allocation11 + $0x4b8] sm:$0xff]
    %v1411 = vld [vmem:[#allocation11 + $0x4c0] sm:$0xff]
    %v1412 = vld [vmem:[#allocation11 + $0x4c8] sm:$0xff]
    %v1413 = vld [vmem:[#allocation11 + $0x4d0] sm:$0xff]
    %v1414 = vld [vmem:[#allocation11 + $0x4d8] sm:$0xff]
    %v1415 = vld [vmem:[#allocation11 + $0x4e0] sm:$0xff]
    %v1416 = vld [vmem:[#allocation11 + $0x4e8] sm:$0xff]
    %v1417 = vld [vmem:[#allocation11 + $0x4f0] sm:$0xff]
    %v1418 = vld [vmem:[#allocation11 + $0x4f8] sm:$0xff]
    %v1419 = vld [vmem:[#allocation11 + $0x500] sm:$0xff]
    %v1420 = vld [vmem:[#allocation11 + $0x508] sm:$0xff]
    %v1421 = vld [vmem:[#allocation11 + $0x510] sm:$0xff]
    %v1422 = vld [vmem:[#allocation11 + $0x518] sm:$0xff]
    %v1423 = vld [vmem:[#allocation11 + $0x520] sm:$0xff]
    %v1424 = vld [vmem:[#allocation11 + $0x528] sm:$0xff]
    %v1425 = vld [vmem:[#allocation11 + $0x530] sm:$0xff]
    %v1426 = vld [vmem:[#allocation11 + $0x538] sm:$0xff]
    %v1427 = vld [vmem:[#allocation11 + $0x540] sm:$0xff]
    %v1428 = vld [vmem:[#allocation11 + $0x548] sm:$0xff]
    %v1429 = vld [vmem:[#allocation11 + $0x550] sm:$0xff]
    %v1430 = vld [vmem:[#allocation11 + $0x558] sm:$0xff]
    %v1431 = vld [vmem:[#allocation11 + $0x560] sm:$0xff]
    %v1432 = vld [vmem:[#allocation11 + $0x568] sm:$0xff]
    %v1433 = vld [vmem:[#allocation11 + $0x570] sm:$0xff]
    %v1434 = vld [vmem:[#allocation11 + $0x578] sm:$0xff]
    %v1435 = vld [vmem:[#allocation11 + $0x580] sm:$0xff]
    %v1436 = vld [vmem:[#allocation11 + $0x588] sm:$0xff]
    %v1437 = vld [vmem:[#allocation11 + $0x590] sm:$0xff]
    %v1438 = vld [vmem:[#allocation11 + $0x598] sm:$0xff]
    %v1439 = vld [vmem:[#allocation11 + $0x5a0] sm:$0xff]
    %v1440 = vld [vmem:[#allocation11 + $0x5a8] sm:$0xff]
    %v1441 = vld [vmem:[#allocation11 + $0x5b0] sm:$0xff]
    %v1442 = vld [vmem:[#allocation11 + $0x5b8] sm:$0xff]
    %v1443 = vld [vmem:[#allocation11 + $0x5c0] sm:$0xff]
    %v1444 = vld [vmem:[#allocation11 + $0x5c8] sm:$0xff]
    %v1445 = vld [vmem:[#allocation11 + $0x5d0] sm:$0xff]
    %v1446 = vld [vmem:[#allocation11 + $0x5d8] sm:$0xff]
    %v1447 = vld [vmem:[#allocation11 + $0x5e0] sm:$0xff]
    %v1448 = vld [vmem:[#allocation11 + $0x5e8] sm:$0xff]
    %v1449 = vld [vmem:[#allocation11 + $0x5f0] sm:$0xff]
    %v1450 = vld [vmem:[#allocation11 + $0x5f8] sm:$0xff]
    %v1451 = vld [vmem:[#allocation11 + $0x600] sm:$0xff]
    %v1452 = vld [vmem:[#allocation11 + $0x608] sm:$0xff]
    %v1453 = vld [vmem:[#allocation11 + $0x610] sm:$0xff]
    %v1454 = vld [vmem:[#allocation11 + $0x618] sm:$0xff]
    %v1455 = vld [vmem:[#allocation11 + $0x620] sm:$0xff]
    %v1456 = vld [vmem:[#allocation11 + $0x628] sm:$0xff]
    %v1457 = vld [vmem:[#allocation11 + $0x630] sm:$0xff]
    %v1458 = vld [vmem:[#allocation11 + $0x638] sm:$0xff]
    %v1459 = vld [vmem:[#allocation11 + $0x640] sm:$0xff]
    %v1460 = vld [vmem:[#allocation11 + $0x648] sm:$0xff]
    %v1461 = vld [vmem:[#allocation11 + $0x650] sm:$0xff]
    %v1462 = vld [vmem:[#allocation11 + $0x658] sm:$0xff]
    %v1463 = vld [vmem:[#allocation11 + $0x660] sm:$0xff]
    %v1464 = vld [vmem:[#allocation11 + $0x668] sm:$0xff]
    %v1465 = vld [vmem:[#allocation11 + $0x670] sm:$0xff]
    %v1466 = vld [vmem:[#allocation11 + $0x678] sm:$0xff]
    %v1467 = vld [vmem:[#allocation11 + $0x680] sm:$0xff]
    %v1468 = vld [vmem:[#allocation11 + $0x688] sm:$0xff]
    %v1469 = vld [vmem:[#allocation11 + $0x690] sm:$0xff]
    %v1470 = vld [vmem:[#allocation11 + $0x698] sm:$0xff]
    %v1471 = vld [vmem:[#allocation11 + $0x6a0] sm:$0xff]
    %v1472 = vld [vmem:[#allocation11 + $0x6a8] sm:$0xff]
    %v1473 = vld [vmem:[#allocation11 + $0x6b0] sm:$0xff]
    %v1474 = vld [vmem:[#allocation11 + $0x6b8] sm:$0xff]
    %v1475 = vld [vmem:[#allocation11 + $0x6c0] sm:$0xff]
    %v1476 = vld [vmem:[#allocation11 + $0x6c8] sm:$0xff]
    %v1477 = vld [vmem:[#allocation11 + $0x6d0] sm:$0xff]
    %v1478 = vld [vmem:[#allocation11 + $0x6d8] sm:$0xff]
    %v1479 = vld [vmem:[#allocation11 + $0x6e0] sm:$0xff]
    %v1480 = vld [vmem:[#allocation11 + $0x6e8] sm:$0xff]
    %v1481 = vld [vmem:[#allocation11 + $0x6f0] sm:$0xff]
    %v1482 = vld [vmem:[#allocation11 + $0x6f8] sm:$0xff]
    %v1483 = vld [vmem:[#allocation11 + $0x700] sm:$0xff]
    %v1484 = vld [vmem:[#allocation11 + $0x708] sm:$0xff]
    %v1485 = vld [vmem:[#allocation11 + $0x710] sm:$0xff]
    %v1486 = vld [vmem:[#allocation11 + $0x718] sm:$0xff]
    %v1487 = vld [vmem:[#allocation11 + $0x720] sm:$0xff]
    %v1488 = vld [vmem:[#allocation11 + $0x728] sm:$0xff]
    %v1489 = vld [vmem:[#allocation11 + $0x730] sm:$0xff]
    %v1490 = vld [vmem:[#allocation11 + $0x738] sm:$0xff]
    %v1491 = vld [vmem:[#allocation11 + $0x740] sm:$0xff]
    %v1492 = vld [vmem:[#allocation11 + $0x748] sm:$0xff]
    %v1493 = vld [vmem:[#allocation11 + $0x750] sm:$0xff]
    %v1494 = vld [vmem:[#allocation11 + $0x758] sm:$0xff]
    %v1495 = vld [vmem:[#allocation11 + $0x760] sm:$0xff]
    %v1496 = vld [vmem:[#allocation11 + $0x768] sm:$0xff]
    %v1497 = vld [vmem:[#allocation11 + $0x770] sm:$0xff]
    %v1498 = vld [vmem:[#allocation11 + $0x778] sm:$0xff]
    %v1499 = vld [vmem:[#allocation11 + $0x780] sm:$0xff]
    %v1500 = vld [vmem:[#allocation11 + $0x788] sm:$0xff]
    %v1501 = vld [vmem:[#allocation11 + $0x790] sm:$0xff]
    %v1502 = vld [vmem:[#allocation11 + $0x798] sm:$0xff]
    %v1503 = vld [vmem:[#allocation11 + $0x7a0] sm:$0xff]
    %v1504 = vld [vmem:[#allocation11 + $0x7a8] sm:$0xff]
    %v1505 = vld [vmem:[#allocation11 + $0x7b0] sm:$0xff]
    %v1506 = vld [vmem:[#allocation11 + $0x7b8] sm:$0xff]
    %v1507 = vld [vmem:[#allocation11 + $0x7c0] sm:$0xff]
    %v1508 = vld [vmem:[#allocation11 + $0x7c8] sm:$0xff]
    %v1509 = vld [vmem:[#allocation11 + $0x7d0] sm:$0xff]
    %v1510 = vld [vmem:[#allocation11 + $0x7d8] sm:$0xff]
    %v1511 = vld [vmem:[#allocation11 + $0x7e0] sm:$0xff]
    %v1512 = vld [vmem:[#allocation11 + $0x7e8] sm:$0xff]
    %v1513 = vld [vmem:[#allocation11 + $0x7f0] sm:$0xff]
    %v1514 = vld [vmem:[#allocation11 + $0x7f8] sm:$0xff]
    %v1515 = vld [vmem:[%s6] sm:$0xf]
    %v1517 = vperm.slane %v1515, 0
    %v1518 = vperm.slane %v1515, 1
    %v1519 = vperm.slane %v1515, 2
    %v1520 = vperm.slane %v1515, 3
    %v1781 = vunpack.c.l.b16 %v1259
    %v1782 = vunpack.c.h.b16 %v1259
    %v1783 = vunpack.c.l.b16 %v1260
    %v1784 = vunpack.c.h.b16 %v1260
    %v1785 = vunpack.c.l.b16 %v1261
    %v1786 = vunpack.c.h.b16 %v1261
    %v1787 = vunpack.c.l.b16 %v1262
    %v1788 = vunpack.c.h.b16 %v1262
    %v1789 = vunpack.c.l.b16 %v1263
    %v1790 = vunpack.c.h.b16 %v1263
    %v1791 = vunpack.c.l.b16 %v1264
    %v1792 = vunpack.c.h.b16 %v1264
    %v1793 = vunpack.c.l.b16 %v1265
    %v1794 = vunpack.c.h.b16 %v1265
    %v1795 = vunpack.c.l.b16 %v1266
    %v1796 = vunpack.c.h.b16 %v1266
    %v1797 = vunpack.c.l.b16 %v1267
    %v1798 = vunpack.c.h.b16 %v1267
    %v1799 = vunpack.c.l.b16 %v1268
    %v1800 = vunpack.c.h.b16 %v1268
    %v1801 = vunpack.c.l.b16 %v1269
    %v1802 = vunpack.c.h.b16 %v1269
    %v1803 = vunpack.c.l.b16 %v1270
    %v1804 = vunpack.c.h.b16 %v1270
    %v1805 = vunpack.c.l.b16 %v1271
    %v1806 = vunpack.c.h.b16 %v1271
    %v1807 = vunpack.c.l.b16 %v1272
    %v1808 = vunpack.c.h.b16 %v1272
    %v1809 = vunpack.c.l.b16 %v1273
    %v1810 = vunpack.c.h.b16 %v1273
    %v1811 = vunpack.c.l.b16 %v1274
    %v1812 = vunpack.c.h.b16 %v1274
    %v1813 = vunpack.c.l.b16 %v1275
    %v1814 = vunpack.c.h.b16 %v1275
    %v1815 = vunpack.c.l.b16 %v1276
    %v1816 = vunpack.c.h.b16 %v1276
    %v1817 = vunpack.c.l.b16 %v1277
    %v1818 = vunpack.c.h.b16 %v1277
    %v1819 = vunpack.c.l.b16 %v1278
    %v1820 = vunpack.c.h.b16 %v1278
    %v1821 = vunpack.c.l.b16 %v1279
    %v1822 = vunpack.c.h.b16 %v1279
    %v1823 = vunpack.c.l.b16 %v1280
    %v1824 = vunpack.c.h.b16 %v1280
    %v1825 = vunpack.c.l.b16 %v1281
    %v1826 = vunpack.c.h.b16 %v1281
    %v1827 = vunpack.c.l.b16 %v1282
    %v1828 = vunpack.c.h.b16 %v1282
    %v1829 = vunpack.c.l.b16 %v1283
    %v1830 = vunpack.c.h.b16 %v1283
    %v1831 = vunpack.c.l.b16 %v1284
    %v1832 = vunpack.c.h.b16 %v1284
    %v1833 = vunpack.c.l.b16 %v1285
    %v1834 = vunpack.c.h.b16 %v1285
    %v1835 = vunpack.c.l.b16 %v1286
    %v1836 = vunpack.c.h.b16 %v1286
    %v1837 = vunpack.c.l.b16 %v1287
    %v1838 = vunpack.c.h.b16 %v1287
    %v1839 = vunpack.c.l.b16 %v1288
    %v1840 = vunpack.c.h.b16 %v1288
    %v1841 = vunpack.c.l.b16 %v1289
    %v1842 = vunpack.c.h.b16 %v1289
    %v1843 = vunpack.c.l.b16 %v1290
    %v1844 = vunpack.c.h.b16 %v1290
    %v1845 = vunpack.c.l.b16 %v1291
    %v1846 = vunpack.c.h.b16 %v1291
    %v1847 = vunpack.c.l.b16 %v1292
    %v1848 = vunpack.c.h.b16 %v1292
    %v1849 = vunpack.c.l.b16 %v1293
    %v1850 = vunpack.c.h.b16 %v1293
    %v1851 = vunpack.c.l.b16 %v1294
    %v1852 = vunpack.c.h.b16 %v1294
    %v1853 = vunpack.c.l.b16 %v1295
    %v1854 = vunpack.c.h.b16 %v1295
    %v1855 = vunpack.c.l.b16 %v1296
    %v1856 = vunpack.c.h.b16 %v1296
    %v1857 = vunpack.c.l.b16 %v1297
    %v1858 = vunpack.c.h.b16 %v1297
    %v1859 = vunpack.c.l.b16 %v1298
    %v1860 = vunpack.c.h.b16 %v1298
    %v1861 = vunpack.c.l.b16 %v1299
    %v1862 = vunpack.c.h.b16 %v1299
    %v1863 = vunpack.c.l.b16 %v1300
    %v1864 = vunpack.c.h.b16 %v1300
    %v1865 = vunpack.c.l.b16 %v1301
    %v1866 = vunpack.c.h.b16 %v1301
    %v1867 = vunpack.c.l.b16 %v1302
    %v1868 = vunpack.c.h.b16 %v1302
    %v1869 = vunpack.c.l.b16 %v1303
    %v1870 = vunpack.c.h.b16 %v1303
    %v1871 = vunpack.c.l.b16 %v1304
    %v1872 = vunpack.c.h.b16 %v1304
    %v1873 = vunpack.c.l.b16 %v1305
    %v1874 = vunpack.c.h.b16 %v1305
    %v1875 = vunpack.c.l.b16 %v1306
    %v1876 = vunpack.c.h.b16 %v1306
    %v1877 = vunpack.c.l.b16 %v1307
    %v1878 = vunpack.c.h.b16 %v1307
    %v1879 = vunpack.c.l.b16 %v1308
    %v1880 = vunpack.c.h.b16 %v1308
    %v1881 = vunpack.c.l.b16 %v1309
    %v1882 = vunpack.c.h.b16 %v1309
    %v1883 = vunpack.c.l.b16 %v1310
    %v1884 = vunpack.c.h.b16 %v1310
    %v1885 = vunpack.c.l.b16 %v1311
    %v1886 = vunpack.c.h.b16 %v1311
    %v1887 = vunpack.c.l.b16 %v1312
    %v1888 = vunpack.c.h.b16 %v1312
    %v1889 = vunpack.c.l.b16 %v1313
    %v1890 = vunpack.c.h.b16 %v1313
    %v1891 = vunpack.c.l.b16 %v1314
    %v1892 = vunpack.c.h.b16 %v1314
    %v1893 = vunpack.c.l.b16 %v1315
    %v1894 = vunpack.c.h.b16 %v1315
    %v1895 = vunpack.c.l.b16 %v1316
    %v1896 = vunpack.c.h.b16 %v1316
    %v1897 = vunpack.c.l.b16 %v1317
    %v1898 = vunpack.c.h.b16 %v1317
    %v1899 = vunpack.c.l.b16 %v1318
    %v1900 = vunpack.c.h.b16 %v1318
    %v1901 = vunpack.c.l.b16 %v1319
    %v1902 = vunpack.c.h.b16 %v1319
    %v1903 = vunpack.c.l.b16 %v1320
    %v1904 = vunpack.c.h.b16 %v1320
    %v1905 = vunpack.c.l.b16 %v1321
    %v1906 = vunpack.c.h.b16 %v1321
    %v1907 = vunpack.c.l.b16 %v1322
    %v1908 = vunpack.c.h.b16 %v1322
    %v1909 = vunpack.c.l.b16 %v1323
    %v1910 = vunpack.c.h.b16 %v1323
    %v1911 = vunpack.c.l.b16 %v1324
    %v1912 = vunpack.c.h.b16 %v1324
    %v1913 = vunpack.c.l.b16 %v1325
    %v1914 = vunpack.c.h.b16 %v1325
    %v1915 = vunpack.c.l.b16 %v1326
    %v1916 = vunpack.c.h.b16 %v1326
    %v1917 = vunpack.c.l.b16 %v1327
    %v1918 = vunpack.c.h.b16 %v1327
    %v1919 = vunpack.c.l.b16 %v1328
    %v1920 = vunpack.c.h.b16 %v1328
    %v1921 = vunpack.c.l.b16 %v1329
    %v1922 = vunpack.c.h.b16 %v1329
    %v1923 = vunpack.c.l.b16 %v1330
    %v1924 = vunpack.c.h.b16 %v1330
    %v1925 = vunpack.c.l.b16 %v1331
    %v1926 = vunpack.c.h.b16 %v1331
    %v1927 = vunpack.c.l.b16 %v1332
    %v1928 = vunpack.c.h.b16 %v1332
    %v1929 = vunpack.c.l.b16 %v1333
    %v1930 = vunpack.c.h.b16 %v1333
    %v1931 = vunpack.c.l.b16 %v1334
    %v1932 = vunpack.c.h.b16 %v1334
    %v1933 = vunpack.c.l.b16 %v1335
    %v1934 = vunpack.c.h.b16 %v1335
    %v1935 = vunpack.c.l.b16 %v1336
    %v1936 = vunpack.c.h.b16 %v1336
    %v1937 = vunpack.c.l.b16 %v1337
    %v1938 = vunpack.c.h.b16 %v1337
    %v1939 = vunpack.c.l.b16 %v1338
    %v1940 = vunpack.c.h.b16 %v1338
    %v1941 = vunpack.c.l.b16 %v1339
    %v1942 = vunpack.c.h.b16 %v1339
    %v1943 = vunpack.c.l.b16 %v1340
    %v1944 = vunpack.c.h.b16 %v1340
    %v1945 = vunpack.c.l.b16 %v1341
    %v1946 = vunpack.c.h.b16 %v1341
    %v1947 = vunpack.c.l.b16 %v1342
    %v1948 = vunpack.c.h.b16 %v1342
    %v1949 = vunpack.c.l.b16 %v1343
    %v1950 = vunpack.c.h.b16 %v1343
    %v1951 = vunpack.c.l.b16 %v1344
    %v1952 = vunpack.c.h.b16 %v1344
    %v1953 = vunpack.c.l.b16 %v1345
    %v1954 = vunpack.c.h.b16 %v1345
    %v1955 = vunpack.c.l.b16 %v1346
    %v1956 = vunpack.c.h.b16 %v1346
    %v1957 = vunpack.c.l.b16 %v1347
    %v1958 = vunpack.c.h.b16 %v1347
    %v1959 = vunpack.c.l.b16 %v1348
    %v1960 = vunpack.c.h.b16 %v1348
    %v1961 = vunpack.c.l.b16 %v1349
    %v1962 = vunpack.c.h.b16 %v1349
    %v1963 = vunpack.c.l.b16 %v1350
    %v1964 = vunpack.c.h.b16 %v1350
    %v1965 = vunpack.c.l.b16 %v1351
    %v1966 = vunpack.c.h.b16 %v1351
    %v1967 = vunpack.c.l.b16 %v1352
    %v1968 = vunpack.c.h.b16 %v1352
    %v1969 = vunpack.c.l.b16 %v1353
    %v1970 = vunpack.c.h.b16 %v1353
    %v1971 = vunpack.c.l.b16 %v1354
    %v1972 = vunpack.c.h.b16 %v1354
    %v1973 = vunpack.c.l.b16 %v1355
    %v1974 = vunpack.c.h.b16 %v1355
    %v1975 = vunpack.c.l.b16 %v1356
    %v1976 = vunpack.c.h.b16 %v1356
    %v1977 = vunpack.c.l.b16 %v1357
    %v1978 = vunpack.c.h.b16 %v1357
    %v1979 = vunpack.c.l.b16 %v1358
    %v1980 = vunpack.c.h.b16 %v1358
    %v1981 = vunpack.c.l.b16 %v1359
    %v1982 = vunpack.c.h.b16 %v1359
    %v1983 = vunpack.c.l.b16 %v1360
    %v1984 = vunpack.c.h.b16 %v1360
    %v1985 = vunpack.c.l.b16 %v1361
    %v1986 = vunpack.c.h.b16 %v1361
    %v1987 = vunpack.c.l.b16 %v1362
    %v1988 = vunpack.c.h.b16 %v1362
    %v1989 = vunpack.c.l.b16 %v1363
    %v1990 = vunpack.c.h.b16 %v1363
    %v1991 = vunpack.c.l.b16 %v1364
    %v1992 = vunpack.c.h.b16 %v1364
    %v1993 = vunpack.c.l.b16 %v1365
    %v1994 = vunpack.c.h.b16 %v1365
    %v1995 = vunpack.c.l.b16 %v1366
    %v1996 = vunpack.c.h.b16 %v1366
    %v1997 = vunpack.c.l.b16 %v1367
    %v1998 = vunpack.c.h.b16 %v1367
    %v1999 = vunpack.c.l.b16 %v1368
    %v2000 = vunpack.c.h.b16 %v1368
    %v2001 = vunpack.c.l.b16 %v1369
    %v2002 = vunpack.c.h.b16 %v1369
    %v2003 = vunpack.c.l.b16 %v1370
    %v2004 = vunpack.c.h.b16 %v1370
    %v2005 = vunpack.c.l.b16 %v1371
    %v2006 = vunpack.c.h.b16 %v1371
    %v2007 = vunpack.c.l.b16 %v1372
    %v2008 = vunpack.c.h.b16 %v1372
    %v2009 = vunpack.c.l.b16 %v1373
    %v2010 = vunpack.c.h.b16 %v1373
    %v2011 = vunpack.c.l.b16 %v1374
    %v2012 = vunpack.c.h.b16 %v1374
    %v2013 = vunpack.c.l.b16 %v1375
    %v2014 = vunpack.c.h.b16 %v1375
    %v2015 = vunpack.c.l.b16 %v1376
    %v2016 = vunpack.c.h.b16 %v1376
    %v2017 = vunpack.c.l.b16 %v1377
    %v2018 = vunpack.c.h.b16 %v1377
    %v2019 = vunpack.c.l.b16 %v1378
    %v2020 = vunpack.c.h.b16 %v1378
    %v2021 = vunpack.c.l.b16 %v1379
    %v2022 = vunpack.c.h.b16 %v1379
    %v2023 = vunpack.c.l.b16 %v1380
    %v2024 = vunpack.c.h.b16 %v1380
    %v2025 = vunpack.c.l.b16 %v1381
    %v2026 = vunpack.c.h.b16 %v1381
    %v2027 = vunpack.c.l.b16 %v1382
    %v2028 = vunpack.c.h.b16 %v1382
    %v2029 = vunpack.c.l.b16 %v1383
    %v2030 = vunpack.c.h.b16 %v1383
    %v2031 = vunpack.c.l.b16 %v1384
    %v2032 = vunpack.c.h.b16 %v1384
    %v2033 = vunpack.c.l.b16 %v1385
    %v2034 = vunpack.c.h.b16 %v1385
    %v2035 = vunpack.c.l.b16 %v1386
    %v2036 = vunpack.c.h.b16 %v1386
    %v2037 = vunpack.c.l.b16 %v1387
    %v2038 = vunpack.c.h.b16 %v1387
    %v2039 = vunpack.c.l.b16 %v1388
    %v2040 = vunpack.c.h.b16 %v1388
    %v2041 = vunpack.c.l.b16 %v1389
    %v2042 = vunpack.c.h.b16 %v1389
    %v2043 = vunpack.c.l.b16 %v1390
    %v2044 = vunpack.c.h.b16 %v1390
    %v2045 = vunpack.c.l.b16 %v1391
    %v2046 = vunpack.c.h.b16 %v1391
    %v2047 = vunpack.c.l.b16 %v1392
    %v2048 = vunpack.c.h.b16 %v1392
    %v2049 = vunpack.c.l.b16 %v1393
    %v2050 = vunpack.c.h.b16 %v1393
    %v2051 = vunpack.c.l.b16 %v1394
    %v2052 = vunpack.c.h.b16 %v1394
    %v2053 = vunpack.c.l.b16 %v1395
    %v2054 = vunpack.c.h.b16 %v1395
    %v2055 = vunpack.c.l.b16 %v1396
    %v2056 = vunpack.c.h.b16 %v1396
    %v2057 = vunpack.c.l.b16 %v1397
    %v2058 = vunpack.c.h.b16 %v1397
    %v2059 = vunpack.c.l.b16 %v1398
    %v2060 = vunpack.c.h.b16 %v1398
    %v2061 = vunpack.c.l.b16 %v1399
    %v2062 = vunpack.c.h.b16 %v1399
    %v2063 = vunpack.c.l.b16 %v1400
    %v2064 = vunpack.c.h.b16 %v1400
    %v2065 = vunpack.c.l.b16 %v1401
    %v2066 = vunpack.c.h.b16 %v1401
    %v2067 = vunpack.c.l.b16 %v1402
    %v2068 = vunpack.c.h.b16 %v1402
    %v2069 = vunpack.c.l.b16 %v1403
    %v2070 = vunpack.c.h.b16 %v1403
    %v2071 = vunpack.c.l.b16 %v1404
    %v2072 = vunpack.c.h.b16 %v1404
    %v2073 = vunpack.c.l.b16 %v1405
    %v2074 = vunpack.c.h.b16 %v1405
    %v2075 = vunpack.c.l.b16 %v1406
    %v2076 = vunpack.c.h.b16 %v1406
    %v2077 = vunpack.c.l.b16 %v1407
    %v2078 = vunpack.c.h.b16 %v1407
    %v2079 = vunpack.c.l.b16 %v1408
    %v2080 = vunpack.c.h.b16 %v1408
    %v2081 = vunpack.c.l.b16 %v1409
    %v2082 = vunpack.c.h.b16 %v1409
    %v2083 = vunpack.c.l.b16 %v1410
    %v2084 = vunpack.c.h.b16 %v1410
    %v2085 = vunpack.c.l.b16 %v1411
    %v2086 = vunpack.c.h.b16 %v1411
    %v2087 = vunpack.c.l.b16 %v1412
    %v2088 = vunpack.c.h.b16 %v1412
    %v2089 = vunpack.c.l.b16 %v1413
    %v2090 = vunpack.c.h.b16 %v1413
    %v2091 = vunpack.c.l.b16 %v1414
    %v2092 = vunpack.c.h.b16 %v1414
    %v2093 = vunpack.c.l.b16 %v1415
    %v2094 = vunpack.c.h.b16 %v1415
    %v2095 = vunpack.c.l.b16 %v1416
    %v2096 = vunpack.c.h.b16 %v1416
    %v2097 = vunpack.c.l.b16 %v1417
    %v2098 = vunpack.c.h.b16 %v1417
    %v2099 = vunpack.c.l.b16 %v1418
    %v2100 = vunpack.c.h.b16 %v1418
    %v2101 = vunpack.c.l.b16 %v1419
    %v2102 = vunpack.c.h.b16 %v1419
    %v2103 = vunpack.c.l.b16 %v1420
    %v2104 = vunpack.c.h.b16 %v1420
    %v2105 = vunpack.c.l.b16 %v1421
    %v2106 = vunpack.c.h.b16 %v1421
    %v2107 = vunpack.c.l.b16 %v1422
    %v2108 = vunpack.c.h.b16 %v1422
    %v2109 = vunpack.c.l.b16 %v1423
    %v2110 = vunpack.c.h.b16 %v1423
    %v2111 = vunpack.c.l.b16 %v1424
    %v2112 = vunpack.c.h.b16 %v1424
    %v2113 = vunpack.c.l.b16 %v1425
    %v2114 = vunpack.c.h.b16 %v1425
    %v2115 = vunpack.c.l.b16 %v1426
    %v2116 = vunpack.c.h.b16 %v1426
    %v2117 = vunpack.c.l.b16 %v1427
    %v2118 = vunpack.c.h.b16 %v1427
    %v2119 = vunpack.c.l.b16 %v1428
    %v2120 = vunpack.c.h.b16 %v1428
    %v2121 = vunpack.c.l.b16 %v1429
    %v2122 = vunpack.c.h.b16 %v1429
    %v2123 = vunpack.c.l.b16 %v1430
    %v2124 = vunpack.c.h.b16 %v1430
    %v2125 = vunpack.c.l.b16 %v1431
    %v2126 = vunpack.c.h.b16 %v1431
    %v2127 = vunpack.c.l.b16 %v1432
    %v2128 = vunpack.c.h.b16 %v1432
    %v2129 = vunpack.c.l.b16 %v1433
    %v2130 = vunpack.c.h.b16 %v1433
    %v2131 = vunpack.c.l.b16 %v1434
    %v2132 = vunpack.c.h.b16 %v1434
    %v2133 = vunpack.c.l.b16 %v1435
    %v2134 = vunpack.c.h.b16 %v1435
    %v2135 = vunpack.c.l.b16 %v1436
    %v2136 = vunpack.c.h.b16 %v1436
    %v2137 = vunpack.c.l.b16 %v1437
    %v2138 = vunpack.c.h.b16 %v1437
    %v2139 = vunpack.c.l.b16 %v1438
    %v2140 = vunpack.c.h.b16 %v1438
    %v2141 = vunpack.c.l.b16 %v1439
    %v2142 = vunpack.c.h.b16 %v1439
    %v2143 = vunpack.c.l.b16 %v1440
    %v2144 = vunpack.c.h.b16 %v1440
    %v2145 = vunpack.c.l.b16 %v1441
    %v2146 = vunpack.c.h.b16 %v1441
    %v2147 = vunpack.c.l.b16 %v1442
    %v2148 = vunpack.c.h.b16 %v1442
    %v2149 = vunpack.c.l.b16 %v1443
    %v2150 = vunpack.c.h.b16 %v1443
    %v2151 = vunpack.c.l.b16 %v1444
    %v2152 = vunpack.c.h.b16 %v1444
    %v2153 = vunpack.c.l.b16 %v1445
    %v2154 = vunpack.c.h.b16 %v1445
    %v2155 = vunpack.c.l.b16 %v1446
    %v2156 = vunpack.c.h.b16 %v1446
    %v2157 = vunpack.c.l.b16 %v1447
    %v2158 = vunpack.c.h.b16 %v1447
    %v2159 = vunpack.c.l.b16 %v1448
    %v2160 = vunpack.c.h.b16 %v1448
    %v2161 = vunpack.c.l.b16 %v1449
    %v2162 = vunpack.c.h.b16 %v1449
    %v2163 = vunpack.c.l.b16 %v1450
    %v2164 = vunpack.c.h.b16 %v1450
    %v2165 = vunpack.c.l.b16 %v1451
    %v2166 = vunpack.c.h.b16 %v1451
    %v2167 = vunpack.c.l.b16 %v1452
    %v2168 = vunpack.c.h.b16 %v1452
    %v2169 = vunpack.c.l.b16 %v1453
    %v2170 = vunpack.c.h.b16 %v1453
    %v2171 = vunpack.c.l.b16 %v1454
    %v2172 = vunpack.c.h.b16 %v1454
    %v2173 = vunpack.c.l.b16 %v1455
    %v2174 = vunpack.c.h.b16 %v1455
    %v2175 = vunpack.c.l.b16 %v1456
    %v2176 = vunpack.c.h.b16 %v1456
    %v2177 = vunpack.c.l.b16 %v1457
    %v2178 = vunpack.c.h.b16 %v1457
    %v2179 = vunpack.c.l.b16 %v1458
    %v2180 = vunpack.c.h.b16 %v1458
    %v2181 = vunpack.c.l.b16 %v1459
    %v2182 = vunpack.c.h.b16 %v1459
    %v2183 = vunpack.c.l.b16 %v1460
    %v2184 = vunpack.c.h.b16 %v1460
    %v2185 = vunpack.c.l.b16 %v1461
    %v2186 = vunpack.c.h.b16 %v1461
    %v2187 = vunpack.c.l.b16 %v1462
    %v2188 = vunpack.c.h.b16 %v1462
    %v2189 = vunpack.c.l.b16 %v1463
    %v2190 = vunpack.c.h.b16 %v1463
    %v2191 = vunpack.c.l.b16 %v1464
    %v2192 = vunpack.c.h.b16 %v1464
    %v2193 = vunpack.c.l.b16 %v1465
    %v2194 = vunpack.c.h.b16 %v1465
    %v2195 = vunpack.c.l.b16 %v1466
    %v2196 = vunpack.c.h.b16 %v1466
    %v2197 = vunpack.c.l.b16 %v1467
    %v2198 = vunpack.c.h.b16 %v1467
    %v2199 = vunpack.c.l.b16 %v1468
    %v2200 = vunpack.c.h.b16 %v1468
    %v2201 = vunpack.c.l.b16 %v1469
    %v2202 = vunpack.c.h.b16 %v1469
    %v2203 = vunpack.c.l.b16 %v1470
    %v2204 = vunpack.c.h.b16 %v1470
    %v2205 = vunpack.c.l.b16 %v1471
    %v2206 = vunpack.c.h.b16 %v1471
    %v2207 = vunpack.c.l.b16 %v1472
    %v2208 = vunpack.c.h.b16 %v1472
    %v2209 = vunpack.c.l.b16 %v1473
    %v2210 = vunpack.c.h.b16 %v1473
    %v2211 = vunpack.c.l.b16 %v1474
    %v2212 = vunpack.c.h.b16 %v1474
    %v2213 = vunpack.c.l.b16 %v1475
    %v2214 = vunpack.c.h.b16 %v1475
    %v2215 = vunpack.c.l.b16 %v1476
    %v2216 = vunpack.c.h.b16 %v1476
    %v2217 = vunpack.c.l.b16 %v1477
    %v2218 = vunpack.c.h.b16 %v1477
    %v2219 = vunpack.c.l.b16 %v1478
    %v2220 = vunpack.c.h.b16 %v1478
    %v2221 = vunpack.c.l.b16 %v1479
    %v2222 = vunpack.c.h.b16 %v1479
    %v2223 = vunpack.c.l.b16 %v1480
    %v2224 = vunpack.c.h.b16 %v1480
    %v2225 = vunpack.c.l.b16 %v1481
    %v2226 = vunpack.c.h.b16 %v1481
    %v2227 = vunpack.c.l.b16 %v1482
    %v2228 = vunpack.c.h.b16 %v1482
    %v2229 = vunpack.c.l.b16 %v1483
    %v2230 = vunpack.c.h.b16 %v1483
    %v2231 = vunpack.c.l.b16 %v1484
    %v2232 = vunpack.c.h.b16 %v1484
    %v2233 = vunpack.c.l.b16 %v1485
    %v2234 = vunpack.c.h.b16 %v1485
    %v2235 = vunpack.c.l.b16 %v1486
    %v2236 = vunpack.c.h.b16 %v1486
    %v2237 = vunpack.c.l.b16 %v1487
    %v2238 = vunpack.c.h.b16 %v1487
    %v2239 = vunpack.c.l.b16 %v1488
    %v2240 = vunpack.c.h.b16 %v1488
    %v2241 = vunpack.c.l.b16 %v1489
    %v2242 = vunpack.c.h.b16 %v1489
    %v2243 = vunpack.c.l.b16 %v1490
    %v2244 = vunpack.c.h.b16 %v1490
    %v2245 = vunpack.c.l.b16 %v1491
    %v2246 = vunpack.c.h.b16 %v1491
    %v2247 = vunpack.c.l.b16 %v1492
    %v2248 = vunpack.c.h.b16 %v1492
    %v2249 = vunpack.c.l.b16 %v1493
    %v2250 = vunpack.c.h.b16 %v1493
    %v2251 = vunpack.c.l.b16 %v1494
    %v2252 = vunpack.c.h.b16 %v1494
    %v2253 = vunpack.c.l.b16 %v1495
    %v2254 = vunpack.c.h.b16 %v1495
    %v2255 = vunpack.c.l.b16 %v1496
    %v2256 = vunpack.c.h.b16 %v1496
    %v2257 = vunpack.c.l.b16 %v1497
    %v2258 = vunpack.c.h.b16 %v1497
    %v2259 = vunpack.c.l.b16 %v1498
    %v2260 = vunpack.c.h.b16 %v1498
    %v2261 = vunpack.c.l.b16 %v1499
    %v2262 = vunpack.c.h.b16 %v1499
    %v2263 = vunpack.c.l.b16 %v1500
    %v2264 = vunpack.c.h.b16 %v1500
    %v2265 = vunpack.c.l.b16 %v1501
    %v2266 = vunpack.c.h.b16 %v1501
    %v2267 = vunpack.c.l.b16 %v1502
    %v2268 = vunpack.c.h.b16 %v1502
    %v2269 = vunpack.c.l.b16 %v1503
    %v2270 = vunpack.c.h.b16 %v1503
    %v2271 = vunpack.c.l.b16 %v1504
    %v2272 = vunpack.c.h.b16 %v1504
    %v2273 = vunpack.c.l.b16 %v1505
    %v2274 = vunpack.c.h.b16 %v1505
    %v2275 = vunpack.c.l.b16 %v1506
    %v2276 = vunpack.c.h.b16 %v1506
    %v2277 = vunpack.c.l.b16 %v1507
    %v2278 = vunpack.c.h.b16 %v1507
    %v2279 = vunpack.c.l.b16 %v1508
    %v2280 = vunpack.c.h.b16 %v1508
    %v2281 = vunpack.c.l.b16 %v1509
    %v2282 = vunpack.c.h.b16 %v1509
    %v2283 = vunpack.c.l.b16 %v1510
    %v2284 = vunpack.c.h.b16 %v1510
    %v2285 = vunpack.c.l.b16 %v1511
    %v2286 = vunpack.c.h.b16 %v1511
    %v2287 = vunpack.c.l.b16 %v1512
    %v2288 = vunpack.c.h.b16 %v1512
    %v2289 = vunpack.c.l.b16 %v1513
    %v2290 = vunpack.c.h.b16 %v1513
    %v2291 = vunpack.c.l.b16 %v1514
    %v2292 = vunpack.c.h.b16 %v1514
    %v2293 = vpack.c.b16 %v1785, %v1781
    %v2294 = vpack.c.b16 %v1786, %v1782
    %v2295 = vpack.c.b16 %v1787, %v1783
    %v2296 = vpack.c.b16 %v1788, %v1784
    %v2297 = vpack.c.b16 %v1793, %v1789
    %v2298 = vpack.c.b16 %v1794, %v1790
    %v2299 = vpack.c.b16 %v1795, %v1791
    %v2300 = vpack.c.b16 %v1796, %v1792
    %v2301 = vpack.c.b16 %v1801, %v1797
    %v2302 = vpack.c.b16 %v1802, %v1798
    %v2303 = vpack.c.b16 %v1803, %v1799
    %v2304 = vpack.c.b16 %v1804, %v1800
    %v2305 = vpack.c.b16 %v1809, %v1805
    %v2306 = vpack.c.b16 %v1810, %v1806
    %v2307 = vpack.c.b16 %v1811, %v1807
    %v2308 = vpack.c.b16 %v1812, %v1808
    %v2309 = vpack.c.b16 %v1817, %v1813
    %v2310 = vpack.c.b16 %v1818, %v1814
    %v2311 = vpack.c.b16 %v1819, %v1815
    %v2312 = vpack.c.b16 %v1820, %v1816
    %v2313 = vpack.c.b16 %v1825, %v1821
    %v2314 = vpack.c.b16 %v1826, %v1822
    %v2315 = vpack.c.b16 %v1827, %v1823
    %v2316 = vpack.c.b16 %v1828, %v1824
    %v2317 = vpack.c.b16 %v1833, %v1829
    %v2318 = vpack.c.b16 %v1834, %v1830
    %v2319 = vpack.c.b16 %v1835, %v1831
    %v2320 = vpack.c.b16 %v1836, %v1832
    %v2321 = vpack.c.b16 %v1841, %v1837
    %v2322 = vpack.c.b16 %v1842, %v1838
    %v2323 = vpack.c.b16 %v1843, %v1839
    %v2324 = vpack.c.b16 %v1844, %v1840
    %v2325 = vpack.c.b16 %v1849, %v1845
    %v2326 = vpack.c.b16 %v1850, %v1846
    %v2327 = vpack.c.b16 %v1851, %v1847
    %v2328 = vpack.c.b16 %v1852, %v1848
    %v2329 = vpack.c.b16 %v1857, %v1853
    %v2330 = vpack.c.b16 %v1858, %v1854
    %v2331 = vpack.c.b16 %v1859, %v1855
    %v2332 = vpack.c.b16 %v1860, %v1856
    %v2333 = vpack.c.b16 %v1865, %v1861
    %v2334 = vpack.c.b16 %v1866, %v1862
    %v2335 = vpack.c.b16 %v1867, %v1863
    %v2336 = vpack.c.b16 %v1868, %v1864
    %v2337 = vpack.c.b16 %v1873, %v1869
    %v2338 = vpack.c.b16 %v1874, %v1870
    %v2339 = vpack.c.b16 %v1875, %v1871
    %v2340 = vpack.c.b16 %v1876, %v1872
    %v2341 = vpack.c.b16 %v1881, %v1877
    %v2342 = vpack.c.b16 %v1882, %v1878
    %v2343 = vpack.c.b16 %v1883, %v1879
    %v2344 = vpack.c.b16 %v1884, %v1880
    %v2345 = vpack.c.b16 %v1889, %v1885
    %v2346 = vpack.c.b16 %v1890, %v1886
    %v2347 = vpack.c.b16 %v1891, %v1887
    %v2348 = vpack.c.b16 %v1892, %v1888
    %v2349 = vpack.c.b16 %v1897, %v1893
    %v2350 = vpack.c.b16 %v1898, %v1894
    %v2351 = vpack.c.b16 %v1899, %v1895
    %v2352 = vpack.c.b16 %v1900, %v1896
    %v2353 = vpack.c.b16 %v1905, %v1901
    %v2354 = vpack.c.b16 %v1906, %v1902
    %v2355 = vpack.c.b16 %v1907, %v1903
    %v2356 = vpack.c.b16 %v1908, %v1904
    %v2357 = vpack.c.b16 %v1913, %v1909
    %v2358 = vpack.c.b16 %v1914, %v1910
    %v2359 = vpack.c.b16 %v1915, %v1911
    %v2360 = vpack.c.b16 %v1916, %v1912
    %v2361 = vpack.c.b16 %v1921, %v1917
    %v2362 = vpack.c.b16 %v1922, %v1918
    %v2363 = vpack.c.b16 %v1923, %v1919
    %v2364 = vpack.c.b16 %v1924, %v1920
    %v2365 = vpack.c.b16 %v1929, %v1925
    %v2366 = vpack.c.b16 %v1930, %v1926
    %v2367 = vpack.c.b16 %v1931, %v1927
    %v2368 = vpack.c.b16 %v1932, %v1928
    %v2369 = vpack.c.b16 %v1937, %v1933
    %v2370 = vpack.c.b16 %v1938, %v1934
    %v2371 = vpack.c.b16 %v1939, %v1935
    %v2372 = vpack.c.b16 %v1940, %v1936
    %v2373 = vpack.c.b16 %v1945, %v1941
    %v2374 = vpack.c.b16 %v1946, %v1942
    %v2375 = vpack.c.b16 %v1947, %v1943
    %v2376 = vpack.c.b16 %v1948, %v1944
    %v2377 = vpack.c.b16 %v1953, %v1949
    %v2378 = vpack.c.b16 %v1954, %v1950
    %v2379 = vpack.c.b16 %v1955, %v1951
    %v2380 = vpack.c.b16 %v1956, %v1952
    %v2381 = vpack.c.b16 %v1961, %v1957
    %v2382 = vpack.c.b16 %v1962, %v1958
    %v2383 = vpack.c.b16 %v1963, %v1959
    %v2384 = vpack.c.b16 %v1964, %v1960
    %v2385 = vpack.c.b16 %v1969, %v1965
    %v2386 = vpack.c.b16 %v1970, %v1966
    %v2387 = vpack.c.b16 %v1971, %v1967
    %v2388 = vpack.c.b16 %v1972, %v1968
    %v2389 = vpack.c.b16 %v1977, %v1973
    %v2390 = vpack.c.b16 %v1978, %v1974
    %v2391 = vpack.c.b16 %v1979, %v1975
    %v2392 = vpack.c.b16 %v1980, %v1976
    %v2393 = vpack.c.b16 %v1985, %v1981
    %v2394 = vpack.c.b16 %v1986, %v1982
    %v2395 = vpack.c.b16 %v1987, %v1983
    %v2396 = vpack.c.b16 %v1988, %v1984
    %v2397 = vpack.c.b16 %v1993, %v1989
    %v2398 = vpack.c.b16 %v1994, %v1990
    %v2399 = vpack.c.b16 %v1995, %v1991
    %v2400 = vpack.c.b16 %v1996, %v1992
    %v2401 = vpack.c.b16 %v2001, %v1997
    %v2402 = vpack.c.b16 %v2002, %v1998
    %v2403 = vpack.c.b16 %v2003, %v1999
    %v2404 = vpack.c.b16 %v2004, %v2000
    %v2405 = vpack.c.b16 %v2009, %v2005
    %v2406 = vpack.c.b16 %v2010, %v2006
    %v2407 = vpack.c.b16 %v2011, %v2007
    %v2408 = vpack.c.b16 %v2012, %v2008
    %v2409 = vpack.c.b16 %v2017, %v2013
    %v2410 = vpack.c.b16 %v2018, %v2014
    %v2411 = vpack.c.b16 %v2019, %v2015
    %v2412 = vpack.c.b16 %v2020, %v2016
    %v2413 = vpack.c.b16 %v2025, %v2021
    %v2414 = vpack.c.b16 %v2026, %v2022
    %v2415 = vpack.c.b16 %v2027, %v2023
    %v2416 = vpack.c.b16 %v2028, %v2024
    %v2417 = vpack.c.b16 %v2033, %v2029
    %v2418 = vpack.c.b16 %v2034, %v2030
    %v2419 = vpack.c.b16 %v2035, %v2031
    %v2420 = vpack.c.b16 %v2036, %v2032
    %v2421 = vpack.c.b16 %v2041, %v2037
    %v2422 = vpack.c.b16 %v2042, %v2038
    %v2423 = vpack.c.b16 %v2043, %v2039
    %v2424 = vpack.c.b16 %v2044, %v2040
    %v2425 = vpack.c.b16 %v2049, %v2045
    %v2426 = vpack.c.b16 %v2050, %v2046
    %v2427 = vpack.c.b16 %v2051, %v2047
    %v2428 = vpack.c.b16 %v2052, %v2048
    %v2429 = vpack.c.b16 %v2057, %v2053
    %v2430 = vpack.c.b16 %v2058, %v2054
    %v2431 = vpack.c.b16 %v2059, %v2055
    %v2432 = vpack.c.b16 %v2060, %v2056
    %v2433 = vpack.c.b16 %v2065, %v2061
    %v2434 = vpack.c.b16 %v2066, %v2062
    %v2435 = vpack.c.b16 %v2067, %v2063
    %v2436 = vpack.c.b16 %v2068, %v2064
    %v2437 = vpack.c.b16 %v2073, %v2069
    %v2438 = vpack.c.b16 %v2074, %v2070
    %v2439 = vpack.c.b16 %v2075, %v2071
    %v2440 = vpack.c.b16 %v2076, %v2072
    %v2441 = vpack.c.b16 %v2081, %v2077
    %v2442 = vpack.c.b16 %v2082, %v2078
    %v2443 = vpack.c.b16 %v2083, %v2079
    %v2444 = vpack.c.b16 %v2084, %v2080
    %v2445 = vpack.c.b16 %v2089, %v2085
    %v2446 = vpack.c.b16 %v2090, %v2086
    %v2447 = vpack.c.b16 %v2091, %v2087
    %v2448 = vpack.c.b16 %v2092, %v2088
    %v2449 = vpack.c.b16 %v2097, %v2093
    %v2450 = vpack.c.b16 %v2098, %v2094
    %v2451 = vpack.c.b16 %v2099, %v2095
    %v2452 = vpack.c.b16 %v2100, %v2096
    %v2453 = vpack.c.b16 %v2105, %v2101
    %v2454 = vpack.c.b16 %v2106, %v2102
    %v2455 = vpack.c.b16 %v2107, %v2103
    %v2456 = vpack.c.b16 %v2108, %v2104
    %v2457 = vpack.c.b16 %v2113, %v2109
    %v2458 = vpack.c.b16 %v2114, %v2110
    %v2459 = vpack.c.b16 %v2115, %v2111
    %v2460 = vpack.c.b16 %v2116, %v2112
    %v2461 = vpack.c.b16 %v2121, %v2117
    %v2462 = vpack.c.b16 %v2122, %v2118
    %v2463 = vpack.c.b16 %v2123, %v2119
    %v2464 = vpack.c.b16 %v2124, %v2120
    %v2465 = vpack.c.b16 %v2129, %v2125
    %v2466 = vpack.c.b16 %v2130, %v2126
    %v2467 = vpack.c.b16 %v2131, %v2127
    %v2468 = vpack.c.b16 %v2132, %v2128
    %v2469 = vpack.c.b16 %v2137, %v2133
    %v2470 = vpack.c.b16 %v2138, %v2134
    %v2471 = vpack.c.b16 %v2139, %v2135
    %v2472 = vpack.c.b16 %v2140, %v2136
    %v2473 = vpack.c.b16 %v2145, %v2141
    %v2474 = vpack.c.b16 %v2146, %v2142
    %v2475 = vpack.c.b16 %v2147, %v2143
    %v2476 = vpack.c.b16 %v2148, %v2144
    %v2477 = vpack.c.b16 %v2153, %v2149
    %v2478 = vpack.c.b16 %v2154, %v2150
    %v2479 = vpack.c.b16 %v2155, %v2151
    %v2480 = vpack.c.b16 %v2156, %v2152
    %v2481 = vpack.c.b16 %v2161, %v2157
    %v2482 = vpack.c.b16 %v2162, %v2158
    %v2483 = vpack.c.b16 %v2163, %v2159
    %v2484 = vpack.c.b16 %v2164, %v2160
    %v2485 = vpack.c.b16 %v2169, %v2165
    %v2486 = vpack.c.b16 %v2170, %v2166
    %v2487 = vpack.c.b16 %v2171, %v2167
    %v2488 = vpack.c.b16 %v2172, %v2168
    %v2489 = vpack.c.b16 %v2177, %v2173
    %v2490 = vpack.c.b16 %v2178, %v2174
    %v2491 = vpack.c.b16 %v2179, %v2175
    %v2492 = vpack.c.b16 %v2180, %v2176
    %v2493 = vpack.c.b16 %v2185, %v2181
    %v2494 = vpack.c.b16 %v2186, %v2182
    %v2495 = vpack.c.b16 %v2187, %v2183
    %v2496 = vpack.c.b16 %v2188, %v2184
    %v2497 = vpack.c.b16 %v2193, %v2189
    %v2498 = vpack.c.b16 %v2194, %v2190
    %v2499 = vpack.c.b16 %v2195, %v2191
    %v2500 = vpack.c.b16 %v2196, %v2192
    %v2501 = vpack.c.b16 %v2201, %v2197
    %v2502 = vpack.c.b16 %v2202, %v2198
    %v2503 = vpack.c.b16 %v2203, %v2199
    %v2504 = vpack.c.b16 %v2204, %v2200
    %v2505 = vpack.c.b16 %v2209, %v2205
    %v2506 = vpack.c.b16 %v2210, %v2206
    %v2507 = vpack.c.b16 %v2211, %v2207
    %v2508 = vpack.c.b16 %v2212, %v2208
    %v2509 = vpack.c.b16 %v2217, %v2213
    %v2510 = vpack.c.b16 %v2218, %v2214
    %v2511 = vpack.c.b16 %v2219, %v2215
    %v2512 = vpack.c.b16 %v2220, %v2216
    %v2513 = vpack.c.b16 %v2225, %v2221
    %v2514 = vpack.c.b16 %v2226, %v2222
    %v2515 = vpack.c.b16 %v2227, %v2223
    %v2516 = vpack.c.b16 %v2228, %v2224
    %v2517 = vpack.c.b16 %v2233, %v2229
    %v2518 = vpack.c.b16 %v2234, %v2230
    %v2519 = vpack.c.b16 %v2235, %v2231
    %v2520 = vpack.c.b16 %v2236, %v2232
    %v2521 = vpack.c.b16 %v2241, %v2237
    %v2522 = vpack.c.b16 %v2242, %v2238
    %v2523 = vpack.c.b16 %v2243, %v2239
    %v2524 = vpack.c.b16 %v2244, %v2240
    %v2525 = vpack.c.b16 %v2249, %v2245
    %v2526 = vpack.c.b16 %v2250, %v2246
    %v2527 = vpack.c.b16 %v2251, %v2247
    %v2528 = vpack.c.b16 %v2252, %v2248
    %v2529 = vpack.c.b16 %v2257, %v2253
    %v2530 = vpack.c.b16 %v2258, %v2254
    %v2531 = vpack.c.b16 %v2259, %v2255
    %v2532 = vpack.c.b16 %v2260, %v2256
    %v2533 = vpack.c.b16 %v2265, %v2261
    %v2534 = vpack.c.b16 %v2266, %v2262
    %v2535 = vpack.c.b16 %v2267, %v2263
    %v2536 = vpack.c.b16 %v2268, %v2264
    %v2537 = vpack.c.b16 %v2273, %v2269
    %v2538 = vpack.c.b16 %v2274, %v2270
    %v2539 = vpack.c.b16 %v2275, %v2271
    %v2540 = vpack.c.b16 %v2276, %v2272
    %v2541 = vpack.c.b16 %v2281, %v2277
    %v2542 = vpack.c.b16 %v2282, %v2278
    %v2543 = vpack.c.b16 %v2283, %v2279
    %v2544 = vpack.c.b16 %v2284, %v2280
    %v2545 = vpack.c.b16 %v2289, %v2285
    %v2546 = vpack.c.b16 %v2290, %v2286
    %v2547 = vpack.c.b16 %v2291, %v2287
    %v2548 = vpack.c.b16 %v2292, %v2288
    %2805 = vmatpush.bf16.msra.mxu0 %v2321
    %2806 = vmatpush.bf16.msra.mxu0 %v2317
    %2807 = vmatpush.bf16.msra.mxu0 %v2313
    %2808 = vmatpush.bf16.msra.mxu0 %v2309
    %2809 = vmatpush.bf16.msra.mxu0 %v2305
    %2810 = vmatpush.bf16.msra.mxu0 %v2301
    %2811 = vmatpush.bf16.msra.mxu0 %v2297
    %2812 = vmatpush.bf16.msra.mxu0 %v2293
    %2813 = vmatmul.bf16.gmra.mxu0 %v1251
    %v2814 = vpop.f32.mrf.mxu0
    %v2815 = vadd.f32 %v1517, %v2814
    %v2816 = vpop.f32.mrf.mxu0
    %2817 = vdwg.mxu0
    %2818 = vmatpush.bf16.msra.mxu0 %v2353
    %2819 = vmatpush.bf16.msra.mxu0 %v2349
    %2820 = vmatpush.bf16.msra.mxu0 %v2345
    %2821 = vmatpush.bf16.msra.mxu0 %v2341
    %2822 = vmatpush.bf16.msra.mxu0 %v2337
    %2823 = vmatpush.bf16.msra.mxu0 %v2333
    %2824 = vmatpush.bf16.msra.mxu0 %v2329
    %2825 = vmatpush.bf16.msra.mxu0 %v2325
    %2826 = vmatmul.bf16.gmra.mxu0 %v1252
    %v2827 = vpop.f32.mrf.mxu0
    %v2828 = vadd.f32 %v2815, %v2827
    %v2829 = vpop.f32.mrf.mxu0
    %2830 = vdwg.mxu0
    %2831 = vmatpush.bf16.msra.mxu0 %v2385
    %2832 = vmatpush.bf16.msra.mxu0 %v2381
    %2833 = vmatpush.bf16.msra.mxu0 %v2377
    %2834 = vmatpush.bf16.msra.mxu0 %v2373
    %2835 = vmatpush.bf16.msra.mxu0 %v2369
    %2836 = vmatpush.bf16.msra.mxu0 %v2365
    %2837 = vmatpush.bf16.msra.mxu0 %v2361
    %2838 = vmatpush.bf16.msra.mxu0 %v2357
    %2839 = vmatmul.bf16.gmra.mxu0 %v1253
    %v2840 = vpop.f32.mrf.mxu0
    %v2841 = vadd.f32 %v2828, %v2840
    %v2842 = vpop.f32.mrf.mxu0
    %2843 = vdwg.mxu0
    %2844 = vmatpush.bf16.msra.mxu0 %v2417
    %2845 = vmatpush.bf16.msra.mxu0 %v2413
    %2846 = vmatpush.bf16.msra.mxu0 %v2409
    %2847 = vmatpush.bf16.msra.mxu0 %v2405
    %2848 = vmatpush.bf16.msra.mxu0 %v2401
    %2849 = vmatpush.bf16.msra.mxu0 %v2397
    %2850 = vmatpush.bf16.msra.mxu0 %v2393
    %2851 = vmatpush.bf16.msra.mxu0 %v2389
    %2852 = vmatmul.bf16.gmra.mxu0 %v1254
    %v2853 = vpop.f32.mrf.mxu0
    %v2854 = vadd.f32 %v2841, %v2853
    %v2855 = vpop.f32.mrf.mxu0
    %2856 = vdwg.mxu0
    %2857 = vmatpush.bf16.msra.mxu0 %v2449
    %2858 = vmatpush.bf16.msra.mxu0 %v2445
    %2859 = vmatpush.bf16.msra.mxu0 %v2441
    %2860 = vmatpush.bf16.msra.mxu0 %v2437
    %2861 = vmatpush.bf16.msra.mxu0 %v2433
    %2862 = vmatpush.bf16.msra.mxu0 %v2429
    %2863 = vmatpush.bf16.msra.mxu0 %v2425
    %2864 = vmatpush.bf16.msra.mxu0 %v2421
    %2865 = vmatmul.bf16.gmra.mxu0 %v1255
    %v2866 = vpop.f32.mrf.mxu0
    %v2867 = vadd.f32 %v2854, %v2866
    %v2868 = vpop.f32.mrf.mxu0
    %2869 = vdwg.mxu0
    %2870 = vmatpush.bf16.msra.mxu0 %v2481
    %2871 = vmatpush.bf16.msra.mxu0 %v2477
    %2872 = vmatpush.bf16.msra.mxu0 %v2473
    %2873 = vmatpush.bf16.msra.mxu0 %v2469
    %2874 = vmatpush.bf16.msra.mxu0 %v2465
    %2875 = vmatpush.bf16.msra.mxu0 %v2461
    %2876 = vmatpush.bf16.msra.mxu0 %v2457
    %2877 = vmatpush.bf16.msra.mxu0 %v2453
    %2878 = vmatmul.bf16.gmra.mxu0 %v1256
    %v2879 = vpop.f32.mrf.mxu0
    %v2880 = vadd.f32 %v2867, %v2879
    %v2881 = vpop.f32.mrf.mxu0
    %2882 = vdwg.mxu0
    %2883 = vmatpush.bf16.msra.mxu0 %v2513
    %2884 = vmatpush.bf16.msra.mxu0 %v2509
    %2885 = vmatpush.bf16.msra.mxu0 %v2505
    %2886 = vmatpush.bf16.msra.mxu0 %v2501
    %2887 = vmatpush.bf16.msra.mxu0 %v2497
    %2888 = vmatpush.bf16.msra.mxu0 %v2493
    %2889 = vmatpush.bf16.msra.mxu0 %v2489
    %2890 = vmatpush.bf16.msra.mxu0 %v2485
    %2891 = vmatmul.bf16.gmra.mxu0 %v1257
    %v2892 = vpop.f32.mrf.mxu0
    %v2893 = vadd.f32 %v2880, %v2892
    %v2894 = vpop.f32.mrf.mxu0
    %2895 = vdwg.mxu0
    %2896 = vmatpush.bf16.msra.mxu0 %v2545
    %2897 = vmatpush.bf16.msra.mxu0 %v2541
    %2898 = vmatpush.bf16.msra.mxu0 %v2537
    %2899 = vmatpush.bf16.msra.mxu0 %v2533
    %2900 = vmatpush.bf16.msra.mxu0 %v2529
    %2901 = vmatpush.bf16.msra.mxu0 %v2525
    %2902 = vmatpush.bf16.msra.mxu0 %v2521
    %2903 = vmatpush.bf16.msra.mxu0 %v2517
    %2904 = vmatmul.bf16.gmra.mxu0 %v1258
    %v2905 = vpop.f32.mrf.mxu0
    %v2906 = vadd.f32 %v2893, %v2905
    %v2907 = vpop.f32.mrf.mxu0
    %2908 = vdwg.mxu0
    %2909 = vmatpush.bf16.msra.mxu0 %v2322
    %2910 = vmatpush.bf16.msra.mxu0 %v2318
    %2911 = vmatpush.bf16.msra.mxu0 %v2314
    %2912 = vmatpush.bf16.msra.mxu0 %v2310
    %2913 = vmatpush.bf16.msra.mxu0 %v2306
    %2914 = vmatpush.bf16.msra.mxu0 %v2302
    %2915 = vmatpush.bf16.msra.mxu0 %v2298
    %2916 = vmatpush.bf16.msra.mxu0 %v2294
    %2917 = vmatmul.bf16.gmra.mxu0 %v1251
    %v2918 = vpop.f32.mrf.mxu0
    %v2919 = vadd.f32 %v1518, %v2918
    %v2920 = vpop.f32.mrf.mxu0
    %2921 = vdwg.mxu0
    %2922 = vmatpush.bf16.msra.mxu0 %v2354
    %2923 = vmatpush.bf16.msra.mxu0 %v2350
    %2924 = vmatpush.bf16.msra.mxu0 %v2346
    %2925 = vmatpush.bf16.msra.mxu0 %v2342
    %2926 = vmatpush.bf16.msra.mxu0 %v2338
    %2927 = vmatpush.bf16.msra.mxu0 %v2334
    %2928 = vmatpush.bf16.msra.mxu0 %v2330
    %2929 = vmatpush.bf16.msra.mxu0 %v2326
    %2930 = vmatmul.bf16.gmra.mxu0 %v1252
    %v2931 = vpop.f32.mrf.mxu0
    %v2932 = vadd.f32 %v2919, %v2931
    %v2933 = vpop.f32.mrf.mxu0
    %2934 = vdwg.mxu0
    %2935 = vmatpush.bf16.msra.mxu0 %v2386
    %2936 = vmatpush.bf16.msra.mxu0 %v2382
    %2937 = vmatpush.bf16.msra.mxu0 %v2378
    %2938 = vmatpush.bf16.msra.mxu0 %v2374
    %2939 = vmatpush.bf16.msra.mxu0 %v2370
    %2940 = vmatpush.bf16.msra.mxu0 %v2366
    %2941 = vmatpush.bf16.msra.mxu0 %v2362
    %2942 = vmatpush.bf16.msra.mxu0 %v2358
    %2943 = vmatmul.bf16.gmra.mxu0 %v1253
    %v2944 = vpop.f32.mrf.mxu0
    %v2945 = vadd.f32 %v2932, %v2944
    %v2946 = vpop.f32.mrf.mxu0
    %2947 = vdwg.mxu0
    %2948 = vmatpush.bf16.msra.mxu0 %v2418
    %2949 = vmatpush.bf16.msra.mxu0 %v2414
    %2950 = vmatpush.bf16.msra.mxu0 %v2410
    %2951 = vmatpush.bf16.msra.mxu0 %v2406
    %2952 = vmatpush.bf16.msra.mxu0 %v2402
    %2953 = vmatpush.bf16.msra.mxu0 %v2398
    %2954 = vmatpush.bf16.msra.mxu0 %v2394
    %2955 = vmatpush.bf16.msra.mxu0 %v2390
    %2956 = vmatmul.bf16.gmra.mxu0 %v1254
    %v2957 = vpop.f32.mrf.mxu0
    %v2958 = vadd.f32 %v2945, %v2957
    %v2959 = vpop.f32.mrf.mxu0
    %2960 = vdwg.mxu0
    %2961 = vmatpush.bf16.msra.mxu0 %v2450
    %2962 = vmatpush.bf16.msra.mxu0 %v2446
    %2963 = vmatpush.bf16.msra.mxu0 %v2442
    %2964 = vmatpush.bf16.msra.mxu0 %v2438
    %2965 = vmatpush.bf16.msra.mxu0 %v2434
    %2966 = vmatpush.bf16.msra.mxu0 %v2430
    %2967 = vmatpush.bf16.msra.mxu0 %v2426
    %2968 = vmatpush.bf16.msra.mxu0 %v2422
    %2969 = vmatmul.bf16.gmra.mxu0 %v1255
    %v2970 = vpop.f32.mrf.mxu0
    %v2971 = vadd.f32 %v2958, %v2970
    %v2972 = vpop.f32.mrf.mxu0
    %2973 = vdwg.mxu0
    %2974 = vmatpush.bf16.msra.mxu0 %v2482
    %2975 = vmatpush.bf16.msra.mxu0 %v2478
    %2976 = vmatpush.bf16.msra.mxu0 %v2474
    %2977 = vmatpush.bf16.msra.mxu0 %v2470
    %2978 = vmatpush.bf16.msra.mxu0 %v2466
    %2979 = vmatpush.bf16.msra.mxu0 %v2462
    %2980 = vmatpush.bf16.msra.mxu0 %v2458
    %2981 = vmatpush.bf16.msra.mxu0 %v2454
    %2982 = vmatmul.bf16.gmra.mxu0 %v1256
    %v2983 = vpop.f32.mrf.mxu0
    %v2984 = vadd.f32 %v2971, %v2983
    %v2985 = vpop.f32.mrf.mxu0
    %2986 = vdwg.mxu0
    %2987 = vmatpush.bf16.msra.mxu0 %v2514
    %2988 = vmatpush.bf16.msra.mxu0 %v2510
    %2989 = vmatpush.bf16.msra.mxu0 %v2506
    %2990 = vmatpush.bf16.msra.mxu0 %v2502
    %2991 = vmatpush.bf16.msra.mxu0 %v2498
    %2992 = vmatpush.bf16.msra.mxu0 %v2494
    %2993 = vmatpush.bf16.msra.mxu0 %v2490
    %2994 = vmatpush.bf16.msra.mxu0 %v2486
    %2995 = vmatmul.bf16.gmra.mxu0 %v1257
    %v2996 = vpop.f32.mrf.mxu0
    %v2997 = vadd.f32 %v2984, %v2996
    %v2998 = vpop.f32.mrf.mxu0
    %2999 = vdwg.mxu0
    %3000 = vmatpush.bf16.msra.mxu0 %v2546
    %3001 = vmatpush.bf16.msra.mxu0 %v2542
    %3002 = vmatpush.bf16.msra.mxu0 %v2538
    %3003 = vmatpush.bf16.msra.mxu0 %v2534
    %3004 = vmatpush.bf16.msra.mxu0 %v2530
    %3005 = vmatpush.bf16.msra.mxu0 %v2526
    %3006 = vmatpush.bf16.msra.mxu0 %v2522
    %3007 = vmatpush.bf16.msra.mxu0 %v2518
    %3008 = vmatmul.bf16.gmra.mxu0 %v1258
    %v3009 = vpop.f32.mrf.mxu0
    %v3010 = vadd.f32 %v2997, %v3009
    %v3011 = vpop.f32.mrf.mxu0
    %3012 = vdwg.mxu0
    %3013 = vmatpush.bf16.msra.mxu0 %v2323
    %3014 = vmatpush.bf16.msra.mxu0 %v2319
    %3015 = vmatpush.bf16.msra.mxu0 %v2315
    %3016 = vmatpush.bf16.msra.mxu0 %v2311
    %3017 = vmatpush.bf16.msra.mxu0 %v2307
    %3018 = vmatpush.bf16.msra.mxu0 %v2303
    %3019 = vmatpush.bf16.msra.mxu0 %v2299
    %3020 = vmatpush.bf16.msra.mxu0 %v2295
    %3021 = vmatmul.bf16.gmra.mxu0 %v1251
    %v3022 = vpop.f32.mrf.mxu0
    %v3023 = vadd.f32 %v1519, %v3022
    %v3024 = vpop.f32.mrf.mxu0
    %3025 = vdwg.mxu0
    %3026 = vmatpush.bf16.msra.mxu0 %v2355
    %3027 = vmatpush.bf16.msra.mxu0 %v2351
    %3028 = vmatpush.bf16.msra.mxu0 %v2347
    %3029 = vmatpush.bf16.msra.mxu0 %v2343
    %3030 = vmatpush.bf16.msra.mxu0 %v2339
    %3031 = vmatpush.bf16.msra.mxu0 %v2335
    %3032 = vmatpush.bf16.msra.mxu0 %v2331
    %3033 = vmatpush.bf16.msra.mxu0 %v2327
    %3034 = vmatmul.bf16.gmra.mxu0 %v1252
    %v3035 = vpop.f32.mrf.mxu0
    %v3036 = vadd.f32 %v3023, %v3035
    %v3037 = vpop.f32.mrf.mxu0
    %3038 = vdwg.mxu0
    %3039 = vmatpush.bf16.msra.mxu0 %v2387
    %3040 = vmatpush.bf16.msra.mxu0 %v2383
    %3041 = vmatpush.bf16.msra.mxu0 %v2379
    %3042 = vmatpush.bf16.msra.mxu0 %v2375
    %3043 = vmatpush.bf16.msra.mxu0 %v2371
    %3044 = vmatpush.bf16.msra.mxu0 %v2367
    %3045 = vmatpush.bf16.msra.mxu0 %v2363
    %3046 = vmatpush.bf16.msra.mxu0 %v2359
    %3047 = vmatmul.bf16.gmra.mxu0 %v1253
    %v3048 = vpop.f32.mrf.mxu0
    %v3049 = vadd.f32 %v3036, %v3048
    %v3050 = vpop.f32.mrf.mxu0
    %3051 = vdwg.mxu0
    %3052 = vmatpush.bf16.msra.mxu0 %v2419
    %3053 = vmatpush.bf16.msra.mxu0 %v2415
    %3054 = vmatpush.bf16.msra.mxu0 %v2411
    %3055 = vmatpush.bf16.msra.mxu0 %v2407
    %3056 = vmatpush.bf16.msra.mxu0 %v2403
    %3057 = vmatpush.bf16.msra.mxu0 %v2399
    %3058 = vmatpush.bf16.msra.mxu0 %v2395
    %3059 = vmatpush.bf16.msra.mxu0 %v2391
    %3060 = vmatmul.bf16.gmra.mxu0 %v1254
    %v3061 = vpop.f32.mrf.mxu0
    %v3062 = vadd.f32 %v3049, %v3061
    %v3063 = vpop.f32.mrf.mxu0
    %3064 = vdwg.mxu0
    %3065 = vmatpush.bf16.msra.mxu0 %v2451
    %3066 = vmatpush.bf16.msra.mxu0 %v2447
    %3067 = vmatpush.bf16.msra.mxu0 %v2443
    %3068 = vmatpush.bf16.msra.mxu0 %v2439
    %3069 = vmatpush.bf16.msra.mxu0 %v2435
    %3070 = vmatpush.bf16.msra.mxu0 %v2431
    %3071 = vmatpush.bf16.msra.mxu0 %v2427
    %3072 = vmatpush.bf16.msra.mxu0 %v2423
    %3073 = vmatmul.bf16.gmra.mxu0 %v1255
    %v3074 = vpop.f32.mrf.mxu0
    %v3075 = vadd.f32 %v3062, %v3074
    %v3076 = vpop.f32.mrf.mxu0
    %3077 = vdwg.mxu0
    %3078 = vmatpush.bf16.msra.mxu0 %v2483
    %3079 = vmatpush.bf16.msra.mxu0 %v2479
    %3080 = vmatpush.bf16.msra.mxu0 %v2475
    %3081 = vmatpush.bf16.msra.mxu0 %v2471
    %3082 = vmatpush.bf16.msra.mxu0 %v2467
    %3083 = vmatpush.bf16.msra.mxu0 %v2463
    %3084 = vmatpush.bf16.msra.mxu0 %v2459
    %3085 = vmatpush.bf16.msra.mxu0 %v2455
    %3086 = vmatmul.bf16.gmra.mxu0 %v1256
    %v3087 = vpop.f32.mrf.mxu0
    %v3088 = vadd.f32 %v3075, %v3087
    %v3089 = vpop.f32.mrf.mxu0
    %3090 = vdwg.mxu0
    %3091 = vmatpush.bf16.msra.mxu0 %v2515
    %3092 = vmatpush.bf16.msra.mxu0 %v2511
    %3093 = vmatpush.bf16.msra.mxu0 %v2507
    %3094 = vmatpush.bf16.msra.mxu0 %v2503
    %3095 = vmatpush.bf16.msra.mxu0 %v2499
    %3096 = vmatpush.bf16.msra.mxu0 %v2495
    %3097 = vmatpush.bf16.msra.mxu0 %v2491
    %3098 = vmatpush.bf16.msra.mxu0 %v2487
    %3099 = vmatmul.bf16.gmra.mxu0 %v1257
    %v3100 = vpop.f32.mrf.mxu0
    %v3101 = vadd.f32 %v3088, %v3100
    %v3102 = vpop.f32.mrf.mxu0
    %3103 = vdwg.mxu0
    %3104 = vmatpush.bf16.msra.mxu0 %v2547
    %3105 = vmatpush.bf16.msra.mxu0 %v2543
    %3106 = vmatpush.bf16.msra.mxu0 %v2539
    %3107 = vmatpush.bf16.msra.mxu0 %v2535
    %3108 = vmatpush.bf16.msra.mxu0 %v2531
    %3109 = vmatpush.bf16.msra.mxu0 %v2527
    %3110 = vmatpush.bf16.msra.mxu0 %v2523
    %3111 = vmatpush.bf16.msra.mxu0 %v2519
    %3112 = vmatmul.bf16.gmra.mxu0 %v1258
    %v3113 = vpop.f32.mrf.mxu0
    %v3114 = vadd.f32 %v3101, %v3113
    %v3115 = vpop.f32.mrf.mxu0
    %3116 = vdwg.mxu0
    %3117 = vmatpush.bf16.msra.mxu0 %v2324
    %3118 = vmatpush.bf16.msra.mxu0 %v2320
    %3119 = vmatpush.bf16.msra.mxu0 %v2316
    %3120 = vmatpush.bf16.msra.mxu0 %v2312
    %3121 = vmatpush.bf16.msra.mxu0 %v2308
    %3122 = vmatpush.bf16.msra.mxu0 %v2304
    %3123 = vmatpush.bf16.msra.mxu0 %v2300
    %3124 = vmatpush.bf16.msra.mxu0 %v2296
    %3125 = vmatmul.bf16.gmra.mxu0 %v1251
    %v3126 = vpop.f32.mrf.mxu0
    %v3127 = vadd.f32 %v1520, %v3126
    %v3128 = vpop.f32.mrf.mxu0
    %3129 = vdwg.mxu0
    %3130 = vmatpush.bf16.msra.mxu0 %v2356
    %3131 = vmatpush.bf16.msra.mxu0 %v2352
    %3132 = vmatpush.bf16.msra.mxu0 %v2348
    %3133 = vmatpush.bf16.msra.mxu0 %v2344
    %3134 = vmatpush.bf16.msra.mxu0 %v2340
    %3135 = vmatpush.bf16.msra.mxu0 %v2336
    %3136 = vmatpush.bf16.msra.mxu0 %v2332
    %3137 = vmatpush.bf16.msra.mxu0 %v2328
    %3138 = vmatmul.bf16.gmra.mxu0 %v1252
    %v3139 = vpop.f32.mrf.mxu0
    %v3140 = vadd.f32 %v3127, %v3139
    %v3141 = vpop.f32.mrf.mxu0
    %3142 = vdwg.mxu0
    %3143 = vmatpush.bf16.msra.mxu0 %v2388
    %3144 = vmatpush.bf16.msra.mxu0 %v2384
    %3145 = vmatpush.bf16.msra.mxu0 %v2380
    %3146 = vmatpush.bf16.msra.mxu0 %v2376
    %3147 = vmatpush.bf16.msra.mxu0 %v2372
    %3148 = vmatpush.bf16.msra.mxu0 %v2368
    %3149 = vmatpush.bf16.msra.mxu0 %v2364
    %3150 = vmatpush.bf16.msra.mxu0 %v2360
    %3151 = vmatmul.bf16.gmra.mxu0 %v1253
    %v3152 = vpop.f32.mrf.mxu0
    %v3153 = vadd.f32 %v3140, %v3152
    %v3154 = vpop.f32.mrf.mxu0
    %3155 = vdwg.mxu0
    %3156 = vmatpush.bf16.msra.mxu0 %v2420
    %3157 = vmatpush.bf16.msra.mxu0 %v2416
    %3158 = vmatpush.bf16.msra.mxu0 %v2412
    %3159 = vmatpush.bf16.msra.mxu0 %v2408
    %3160 = vmatpush.bf16.msra.mxu0 %v2404
    %3161 = vmatpush.bf16.msra.mxu0 %v2400
    %3162 = vmatpush.bf16.msra.mxu0 %v2396
    %3163 = vmatpush.bf16.msra.mxu0 %v2392
    %3164 = vmatmul.bf16.gmra.mxu0 %v1254
    %v3165 = vpop.f32.mrf.mxu0
    %v3166 = vadd.f32 %v3153, %v3165
    %v3167 = vpop.f32.mrf.mxu0
    %3168 = vdwg.mxu0
    %3169 = vmatpush.bf16.msra.mxu0 %v2452
    %3170 = vmatpush.bf16.msra.mxu0 %v2448
    %3171 = vmatpush.bf16.msra.mxu0 %v2444
    %3172 = vmatpush.bf16.msra.mxu0 %v2440
    %3173 = vmatpush.bf16.msra.mxu0 %v2436
    %3174 = vmatpush.bf16.msra.mxu0 %v2432
    %3175 = vmatpush.bf16.msra.mxu0 %v2428
    %3176 = vmatpush.bf16.msra.mxu0 %v2424
    %3177 = vmatmul.bf16.gmra.mxu0 %v1255
    %v3178 = vpop.f32.mrf.mxu0
    %v3179 = vadd.f32 %v3166, %v3178
    %v3180 = vpop.f32.mrf.mxu0
    %3181 = vdwg.mxu0
    %3182 = vmatpush.bf16.msra.mxu0 %v2484
    %3183 = vmatpush.bf16.msra.mxu0 %v2480
    %3184 = vmatpush.bf16.msra.mxu0 %v2476
    %3185 = vmatpush.bf16.msra.mxu0 %v2472
    %3186 = vmatpush.bf16.msra.mxu0 %v2468
    %3187 = vmatpush.bf16.msra.mxu0 %v2464
    %3188 = vmatpush.bf16.msra.mxu0 %v2460
    %3189 = vmatpush.bf16.msra.mxu0 %v2456
    %3190 = vmatmul.bf16.gmra.mxu0 %v1256
    %v3191 = vpop.f32.mrf.mxu0
    %v3192 = vadd.f32 %v3179, %v3191
    %v3193 = vpop.f32.mrf.mxu0
    %3194 = vdwg.mxu0
    %3195 = vmatpush.bf16.msra.mxu0 %v2516
    %3196 = vmatpush.bf16.msra.mxu0 %v2512
    %3197 = vmatpush.bf16.msra.mxu0 %v2508
    %3198 = vmatpush.bf16.msra.mxu0 %v2504
    %3199 = vmatpush.bf16.msra.mxu0 %v2500
    %3200 = vmatpush.bf16.msra.mxu0 %v2496
    %3201 = vmatpush.bf16.msra.mxu0 %v2492
    %3202 = vmatpush.bf16.msra.mxu0 %v2488
    %3203 = vmatmul.bf16.gmra.mxu0 %v1257
    %v3204 = vpop.f32.mrf.mxu0
    %v3205 = vadd.f32 %v3192, %v3204
    %v3206 = vpop.f32.mrf.mxu0
    %3207 = vdwg.mxu0
    %3208 = vmatpush.bf16.msra.mxu0 %v2548
    %3209 = vmatpush.bf16.msra.mxu0 %v2544
    %3210 = vmatpush.bf16.msra.mxu0 %v2540
    %3211 = vmatpush.bf16.msra.mxu0 %v2536
    %3212 = vmatpush.bf16.msra.mxu0 %v2532
    %3213 = vmatpush.bf16.msra.mxu0 %v2528
    %3214 = vmatpush.bf16.msra.mxu0 %v2524
    %3215 = vmatpush.bf16.msra.mxu0 %v2520
    %3216 = vmatmul.bf16.gmra.mxu0 %v1258
    %v3217 = vpop.f32.mrf.mxu0
    %v3218 = vadd.f32 %v3205, %v3217
    %v3219 = vpop.f32.mrf.mxu0
    %3220 = vdwg.mxu0
    %3221 = vst [vmem:[#allocation13] sm:$0xff] %v2906
    %3222 = vst [vmem:[#allocation13 + $0x8] sm:$0xff] %v3010
    %3223 = vst [vmem:[#allocation13 + $0x10] sm:$0xff] %v3114
    %3224 = vst [vmem:[#allocation13 + $0x18] sm:$0xff] %v3218
    // Predicated region
    $region54: #{tpu_custom_call.1} parent=1 // pred_check
      _
    $region55: #{tpu_custom_call.1} parent=1 // pred_check_branch
      %3226 = sbr.rel (0) target = $region57
    $region56: #{tpu_custom_call.1} parent=1 // pred_region
      %3228 = vsyncadd [#allocation4], 0
      %s3230 = sshll.u32 [#allocation13], 4
      %s3231 = int_to_ptr.vmem [resolvable:$true] %s3230
      %s3232 = sshll.u32 %s7, 4
      %s3233 = int_to_ptr.hbm [resolvable:$true] %s3232
      %3235 = dma.vmem_to_hbm [thread:$0]  %s3231, 512, %s3233, [#allocation4]
    $region57: #{tpu_custom_call.1} parent=1 // pred_fallthru
      _
    // Predicated region
    $region58: #{tpu_custom_call.1} parent=1 // pred_check
      _
    $region59: #{tpu_custom_call.1} parent=1 // pred_check_branch
      %3237 = sbr.rel (0) target = $region61
    $region60: #{tpu_custom_call.1} parent=1 // pred_region
      %3239 = dma.done [#allocation4], 512
    $region61: #{tpu_custom_call.1} parent=1 // pred_fallthru
      _
    %3240 = vsyncpa [#allocation3], 1
    %3241 = vsyncpa [#allocation6], 1
    %3242 = vsyncpa [#allocation9], 1
    %3243 = vsyncpa [#allocation12], 1
    %3244 = vsyncpa [#allocation4], 1

</llo_original>
